<compile_context>
chip_gen: v7x
topology: tpu7x:2x2x1
jax: 0.10.0
libtpu: 0.0.40
codegen_flags: <defaults>
</compile_context>

<pallas_src>
import functools

import jax
import jax.numpy as jnp
from jax.experimental import pallas as pl
from jax.experimental.pallas import tpu as pltpu


def _fold_rows(v, acc_r):
    """(rows, 128) -> (acc_r, 128): pairwise-tree sum of row groups.

    Static, tile-boundary-aligned slices; log-depth so the LLO scheduler can
    interleave the independent accumulators instead of one long add chain.
    """
    rows = v.shape[0]
    if rows == acc_r:
        return v
    parts = [v[i * acc_r:(i + 1) * acc_r] for i in range(rows // acc_r)]
    while len(parts) > 1:
        nxt = [parts[i] + parts[i + 1] for i in range(0, len(parts) - 1, 2)]
        if len(parts) % 2:
            nxt.append(parts[-1])
        parts = nxt
    return parts[0]


def _dual_loss_kernel(l1_ref, l2_ref, lab_ref,
                      inter_ref, psq_ref, tsq_ref, ce_ref,
                      *, hw, n_batch, b_per_chunk, n_classes, sanitize):
    """Grid = (chunk, batch-within-chunk, plane_tile).

    Blocks:
      l1_ref / l2_ref : (1, C, tile_p, 128)  logits, native dtype
      lab_ref         : (1, tile_p, 128)     integer labels
    Resident accumulator outputs (one block per chunk):
      inter_ref / psq_ref : (1, 2*C, acc_r, 128) f32
      tsq_ref             : (1, C,   acc_r, 128) f32  (branch-independent)
      ce_ref              : (1, 2,   acc_r, 128) f32
    """
    ck = pl.program_id(0)
    b = pl.program_id(1)
    t = pl.program_id(2)

    @pl.when(jnp.logical_and(b == 0, t == 0))
    def _():
        inter_ref[...] = jnp.zeros_like(inter_ref)
        psq_ref[...] = jnp.zeros_like(psq_ref)
        tsq_ref[...] = jnp.zeros_like(tsq_ref)
        ce_ref[...] = jnp.zeros_like(ce_ref)

    C = n_classes
    tile_p = lab_ref.shape[1]
    acc_r = ce_ref.shape[2]

    # Unclamped batch index; overhanging steps of the last chunk re-read
    # (clamped index_map) batch B-1 but skip all compute below.
    bid = ck * b_per_chunk + b

    @pl.when(bid < n_batch)
    def _compute():
        # Pixel-validity mask: only the last plane block can contain pixels at
        # or beyond HW (ragged 128-pad tail and, if `sanitize`, rows past P).
        pix0 = t * tile_p * 128
        plane = jax.lax.broadcasted_iota(jnp.int32, (tile_p, 128), 0)
        lane = jax.lax.broadcasted_iota(jnp.int32, (tile_p, 128), 1)
        valid = (pix0 + plane * 128 + lane) < hw                # (tile_p, 128)

        labels = lab_ref[0].astype(jnp.int32)                   # (tile_p, 128)
        # Per-class one-hot planes (shared by both branches), gated by `valid`.
        oh = [jnp.where(jnp.logical_and(valid, labels == c), 1.0, 0.0)
              for c in range(C)]

        for br, lref in ((0, l1_ref), (1, l2_ref)):
            xs = [lref[0, c].astype(jnp.float32) for c in range(C)]
            if sanitize:
                # The last plane block overhangs the array: wipe the undefined
                # rows so exp() cannot produce Inf/NaN that survives masking.
                xs = [jnp.where(valid, xc, 0.0) for xc in xs]

            # Numerically stable softmax across the C planes (pure VALU).
            m = xs[0]
            for c in range(1, C):
                m = jnp.maximum(m, xs[c])
            es = [jnp.exp(xs[c] - m) for c in range(C)]
            s = es[0]
            for c in range(1, C):
                s = s + es[c]
            # Mask the reciprocal (one plane) instead of the C prob planes.
            inv_s = jnp.where(valid, 1.0 / s, 0.0)

            # Cross-entropy per pixel: logsumexp - logit[label].
            picked = xs[0] * oh[0]
            for c in range(1, C):
                picked = picked + xs[c] * oh[c]
            ce_pix = jnp.where(valid, (m + jnp.log(s)) - picked, 0.0)
            ce_ref[0, br] = ce_ref[0, br] + _fold_rows(ce_pix, acc_r)

            # Dice partial sums per class.
            for c in range(C):
                p_c = es[c] * inv_s
                idx = br * C + c
                inter_ref[0, idx] = inter_ref[0, idx] + _fold_rows(p_c * oh[c], acc_r)
                psq_ref[0, idx] = psq_ref[0, idx] + _fold_rows(p_c * p_c, acc_r)

        # Target sum is branch-independent (per-class label count): once only.
        for c in range(C):
            tsq_ref[0, c] = tsq_ref[0, c] + _fold_rows(oh[c], acc_r)


def _auto_num_chunks():
    """2 'parallel' chunks on chips with 2 TensorCores behind one device."""
    try:
        kind = jax.devices()[0].device_kind.lower()
    except Exception:
        return 1
    return 2 if "v7" in kind else 1


def dual_branch_dice_and_ce_loss(logits1, logits2, labels, dice_weight=None,
                                 default_dice_weight=0.5, smooth=1e-5,
                                 n_chunks=None):
    """JAX wrapper mirroring DualBranchDiceAndCELoss.forward.

    Returns (loss, loss1, ce1, dice1, loss2, ce2, dice2).
    """
    # PyTorch quirk preserved: `if not dice_weight:` treats an explicit 0.0 as
    # unset and substitutes the default.
    if not dice_weight:
        dice_weight = default_dice_weight

    B, C, H, W = logits1.shape
    HW = H * W

    # --- Re-layout so pixels occupy (plane=sublane, lane) and class is an
    # outer dim.  Contiguous (free) reshapes unless HW % 128 != 0, in which
    # case one pad pass is needed (rare for segmentation crops).
    HW_pad = pl.cdiv(HW, 128) * 128
    P = HW_pad // 128
    l1 = logits1.reshape(B, C, HW)
    l2 = logits2.reshape(B, C, HW)
    lab = labels.reshape(B, HW)
    if not jnp.issubdtype(lab.dtype, jnp.integer):
        lab = lab.astype(jnp.int32)          # matches `.long()` in the module
    if HW_pad != HW:
        pad = HW_pad - HW
        l1 = jnp.pad(l1, ((0, 0), (0, 0), (0, pad)))
        l2 = jnp.pad(l2, ((0, 0), (0, 0), (0, pad)))
        lab = jnp.pad(lab, ((0, 0), (0, pad)))
    l1 = l1.reshape(B, C, P, 128)
    l2 = l2.reshape(B, C, P, 128)
    lab = lab.reshape(B, P, 128)

    # --- Tile sizing: ~2 MiB of logits (both branches) per grid step so DMA
    # time dominates the fixed per-step overhead; also cap the f32 working-set
    # so intermediates + double-buffered inputs stay far inside the explicit
    # 32 MiB VMEM limit on every generation (v7x: 64 MiB physical).
    itemsize = jnp.dtype(logits1.dtype).itemsize
    cap_p = min((2 << 20) // (2 * C * 128 * itemsize),
                (3 << 20) // (C * 128 * 4))
    cap_p = max(8, (cap_p // 8) * 8)
    if P <= cap_p:
        tile_p = P                       # whole per-image plane slab per step
    else:
        tile_p = cap_p
        # Prefer an exact divisor of P so no block overhangs the array.
        for cand in range(cap_p, max(8, cap_p // 2) - 1, -8):
            if P % cand == 0:
                tile_p = cand
                break
    sanitize = (P % tile_p) != 0         # last plane block overhangs the array
    n_pb = pl.cdiv(P, tile_p)
    acc_r = 8 if tile_p % 8 == 0 else tile_p

    # --- Split the batch reduction over a leading "parallel" chunk axis so
    # v7x can use both TensorCores; single chunk elsewhere.
    if n_chunks is None:
        n_chunks = _auto_num_chunks()
    n_chunks = max(1, min(int(n_chunks), B))
    b_per_chunk = pl.cdiv(B, n_chunks)

    def l_map(ck, b, t):
        # Clamp so the last chunk's overhanging batch steps re-read batch B-1
        # (their compute is skipped in-kernel by the bid < B gate).
        return (jnp.minimum(ck * b_per_chunk + b, B - 1), 0, t, 0)

    def lab_map(ck, b, t):
        return (jnp.minimum(ck * b_per_chunk + b, B - 1), t, 0)

    def out_map(ck, b, t):
        return (ck, 0, 0, 0)

    kern = functools.partial(_dual_loss_kernel, hw=HW, n_batch=B,
                             b_per_chunk=b_per_chunk, n_classes=C,
                             sanitize=sanitize)

    out_shapes = (
        jax.ShapeDtypeStruct((n_chunks, 2 * C, acc_r, 128), jnp.float32),  # intersect
        jax.ShapeDtypeStruct((n_chunks, 2 * C, acc_r, 128), jnp.float32),  # sum(p^2)
        jax.ShapeDtypeStruct((n_chunks, C, acc_r, 128), jnp.float32),      # sum(t^2)
        jax.ShapeDtypeStruct((n_chunks, 2, acc_r, 128), jnp.float32),      # CE sum
    )

    inter, psq, tsq, ce = pl.pallas_call(
        kern,
        out_shape=out_shapes,
        grid_spec=pltpu.PrefetchScalarGridSpec(
            num_scalar_prefetch=0,
            grid=(n_chunks, b_per_chunk, n_pb),
            in_specs=[
                pl.BlockSpec((1, C, tile_p, 128), l_map),
                pl.BlockSpec((1, C, tile_p, 128), l_map),
                pl.BlockSpec((1, tile_p, 128), lab_map),
            ],
            out_specs=[
                pl.BlockSpec((1, 2 * C, acc_r, 128), out_map),
                pl.BlockSpec((1, 2 * C, acc_r, 128), out_map),
                pl.BlockSpec((1, C, acc_r, 128), out_map),
                pl.BlockSpec((1, 2, acc_r, 128), out_map),
            ],
        ),
        compiler_params=pltpu.CompilerParams(
            dimension_semantics=("parallel", "arbitrary", "arbitrary"),
            vmem_limit_bytes=32 * 1024 * 1024),
    )(l1, l2, lab)

    # --- Tiny finalization in the wrapper (chunk partials must be combined
    # before the nonlinear dice ratio / CE mean).
    inter_bc = jnp.sum(inter, axis=(0, 2, 3)).reshape(2, C)
    psq_bc = jnp.sum(psq, axis=(0, 2, 3)).reshape(2, C)
    tsq_c = jnp.sum(tsq, axis=(0, 2, 3))                       # (C,)
    ce_sum = jnp.sum(ce, axis=(0, 2, 3))                       # (2,)

    dice_c = 1.0 - (2.0 * inter_bc + smooth) / (psq_bc + tsq_c[None, :] + smooth)
    dice_vals = jnp.mean(dice_c, axis=1)                       # (2,)
    ce_vals = ce_sum / float(B * HW)                           # (2,)

    ce1, ce2 = ce_vals[0], ce_vals[1]
    dice1, dice2 = dice_vals[0], dice_vals[1]
    dw = dice_weight
    loss1 = (1.0 - dw) * ce1 + dw * dice1
    loss2 = (1.0 - dw) * ce2 + dw * dice2
    loss = loss1 + loss2
    return loss, loss1, ce1, dice1, loss2, ce2, dice2


def _reference(logits1, logits2, labels, dice_weight=0.5, smooth=1e-5):
    """Pure-JAX reference matching the PyTorch module."""
    def ce(lo):
        logp = jax.nn.log_softmax(lo.astype(jnp.float32), axis=1)
        oh = jax.nn.one_hot(labels, lo.shape[1], axis=1, dtype=jnp.float32)
        return -jnp.mean(jnp.sum(logp * oh, axis=1))

    def dice(lo):
        p = jax.nn.softmax(lo.astype(jnp.float32), axis=1)
        oh = jax.nn.one_hot(labels, lo.shape[1], axis=1, dtype=jnp.float32)
        inter = jnp.sum(p * oh, axis=(0, 2, 3))
        psq = jnp.sum(p * p, axis=(0, 2, 3))
        tsq = jnp.sum(oh * oh, axis=(0, 2, 3))
        return jnp.mean(1.0 - (2.0 * inter + smooth) / (psq + tsq + smooth))

    ce1, d1 = ce(logits1), dice(logits1)
    ce2, d2 = ce(logits2), dice(logits2)
    l1 = (1 - dice_weight) * ce1 + dice_weight * d1
    l2 = (1 - dice_weight) * ce2 + dice_weight * d2
    return l1 + l2, l1, ce1, d1, l2, ce2, d2


if __name__ == "__main__":
    # Small deterministic example (no learnable params in this loss module).
    B, C, H, W = 2, 4, 16, 16
    key = jax.random.PRNGKey(0)
    k1, k2, k3 = jax.random.split(key, 3)
    logits1 = jax.random.normal(k1, (B, C, H, W), dtype=jnp.float32)
    logits2 = jax.random.normal(k2, (B, C, H, W), dtype=jnp.float32)
    labels = jax.random.randint(k3, (B, H, W), 0, C, dtype=jnp.int32)

    got = dual_branch_dice_and_ce_loss(logits1, logits2, labels)
    got = jax.block_until_ready(got)

    ref = _reference(logits1, logits2, labels)
    for g, r in zip(got, ref):
        assert jnp.allclose(g, r, rtol=1e-4, atol=1e-5), (g, r)

    print("KERNEL_OK")
</pallas_src>

<mosaic_0001>
module attributes {stable_mosaic.version = 11 : i64} {
  func.func @_dual_loss_kernel(%arg0: i32, %arg1: i32, %arg2: i32, %arg3: memref<1x4x2x128xf32, #tpu.memory_space<vmem>>, %arg4: memref<1x4x2x128xf32, #tpu.memory_space<vmem>>, %arg5: memref<1x2x128xi32, #tpu.memory_space<vmem>>, %arg6: memref<1x8x2x128xf32, #tpu.memory_space<vmem>>, %arg7: memref<1x8x2x128xf32, #tpu.memory_space<vmem>>, %arg8: memref<1x4x2x128xf32, #tpu.memory_space<vmem>>, %arg9: memref<1x2x2x128xf32, #tpu.memory_space<vmem>>) attributes {dimension_semantics = [#tpu.dimension_semantics<parallel>, #tpu.dimension_semantics<arbitrary>, #tpu.dimension_semantics<arbitrary>], iteration_bounds = array<i64: 1, 2, 1>, scalar_prefetch = 0 : i64, scratch_operands = 0 : i64, tpu.core_type = #tpu.core_type<tc>, window_params = [{transform_indices = @transform_0, window_bounds = array<i64: 1, 4, 2, 128>}, {transform_indices = @transform_1, window_bounds = array<i64: 1, 4, 2, 128>}, {transform_indices = @transform_2, window_bounds = array<i64: 1, 2, 128>}, {transform_indices = @transform_3, window_bounds = array<i64: 1, 8, 2, 128>}, {transform_indices = @transform_4, window_bounds = array<i64: 1, 8, 2, 128>}, {transform_indices = @transform_5, window_bounds = array<i64: 1, 4, 2, 128>}, {transform_indices = @transform_6, window_bounds = array<i64: 1, 2, 2, 128>}]} {
    %c0_i32 = arith.constant 0 : i32
    %0 = arith.cmpi eq, %arg1, %c0_i32 : i32
    %c0_i32_0 = arith.constant 0 : i32
    %1 = arith.cmpi eq, %arg2, %c0_i32_0 : i32
    %2 = arith.andi %0, %1 : i1
    %3 = arith.extui %2 : i1 to i32
    %c0_i32_1 = arith.constant 0 : i32
    %4 = arith.cmpi ne, %3, %c0_i32_1 : i32
    scf.if %4 {
      %cst = arith.constant 0.000000e+00 : f32
      %10 = vector.broadcast %cst : f32 to vector<1x8x2x128xf32>
      %c0 = arith.constant 0 : index
      %c0_4 = arith.constant 0 : index
      %c0_5 = arith.constant 0 : index
      %c0_6 = arith.constant 0 : index
      %11 = vector.load %arg6[%c0, %c0_4, %c0_5, %c0_6] : memref<1x8x2x128xf32, #tpu.memory_space<vmem>>, vector<1x8x2x128xf32>
      tpu.vector_store %arg6[%c0, %c0_4, %c0_5, %c0_6], %10 {strides = array<i32>} : memref<1x8x2x128xf32, #tpu.memory_space<vmem>>, vector<1x8x2x128xf32>,
      %cst_7 = arith.constant 0.000000e+00 : f32
      %12 = vector.broadcast %cst_7 : f32 to vector<1x8x2x128xf32>
      %c0_8 = arith.constant 0 : index
      %c0_9 = arith.constant 0 : index
      %c0_10 = arith.constant 0 : index
      %c0_11 = arith.constant 0 : index
      %13 = vector.load %arg7[%c0_8, %c0_9, %c0_10, %c0_11] : memref<1x8x2x128xf32, #tpu.memory_space<vmem>>, vector<1x8x2x128xf32>
      tpu.vector_store %arg7[%c0_8, %c0_9, %c0_10, %c0_11], %12 {strides = array<i32>} : memref<1x8x2x128xf32, #tpu.memory_space<vmem>>, vector<1x8x2x128xf32>,
      %cst_12 = arith.constant 0.000000e+00 : f32
      %14 = vector.broadcast %cst_12 : f32 to vector<1x4x2x128xf32>
      %c0_13 = arith.constant 0 : index
      %c0_14 = arith.constant 0 : index
      %c0_15 = arith.constant 0 : index
      %c0_16 = arith.constant 0 : index
      %15 = vector.load %arg8[%c0_13, %c0_14, %c0_15, %c0_16] : memref<1x4x2x128xf32, #tpu.memory_space<vmem>>, vector<1x4x2x128xf32>
      tpu.vector_store %arg8[%c0_13, %c0_14, %c0_15, %c0_16], %14 {strides = array<i32>} : memref<1x4x2x128xf32, #tpu.memory_space<vmem>>, vector<1x4x2x128xf32>,
      %cst_17 = arith.constant 0.000000e+00 : f32
      %16 = vector.broadcast %cst_17 : f32 to vector<1x2x2x128xf32>
      %c0_18 = arith.constant 0 : index
      %c0_19 = arith.constant 0 : index
      %c0_20 = arith.constant 0 : index
      %c0_21 = arith.constant 0 : index
      %17 = vector.load %arg9[%c0_18, %c0_19, %c0_20, %c0_21] : memref<1x2x2x128xf32, #tpu.memory_space<vmem>>, vector<1x2x2x128xf32>
      tpu.vector_store %arg9[%c0_18, %c0_19, %c0_20, %c0_21], %16 {strides = array<i32>} : memref<1x2x2x128xf32, #tpu.memory_space<vmem>>, vector<1x2x2x128xf32>,
    } else {
    }
    %c2_i32 = arith.constant 2 : i32
    %5 = arith.muli %arg0, %c2_i32 : i32
    %6 = arith.addi %5, %arg1 : i32
    %c2_i32_2 = arith.constant 2 : i32
    %7 = arith.cmpi slt, %6, %c2_i32_2 : i32
    %8 = arith.extui %7 : i1 to i32
    %c0_i32_3 = arith.constant 0 : i32
    %9 = arith.cmpi ne, %8, %c0_i32_3 : i32
    scf.if %9 {
      %c2_i32_4 = arith.constant 2 : i32
      %10 = arith.muli %arg2, %c2_i32_4 : i32
      %c128_i32 = arith.constant 128 : i32
      %11 = arith.muli %10, %c128_i32 : i32
      %12 = tpu.iota {dimensions = array<i32: 0>} : vector<2x128xi32>
      %13 = tpu.iota {dimensions = array<i32: 1>} : vector<2x128xi32>
      %c128_i32_5 = arith.constant 128 : i32
      %14 = vector.broadcast %c128_i32_5 : i32 to vector<2x128xi32>
      %15 = arith.muli %12, %14 : vector<2x128xi32>
      %16 = vector.broadcast %11 : i32 to vector<2x128xi32>
      %17 = arith.addi %16, %15 : vector<2x128xi32>
      %18 = arith.addi %17, %13 : vector<2x128xi32>
      %c256_i32 = arith.constant 256 : i32
      %19 = vector.broadcast %c256_i32 : i32 to vector<2x128xi32>
      %20 = arith.cmpi slt, %18, %19 : vector<2x128xi32>
      %c0 = arith.constant 0 : index
      %c0_6 = arith.constant 0 : index
      %c0_7 = arith.constant 0 : index
      %21 = vector.load %arg5[%c0, %c0_6, %c0_7] : memref<1x2x128xi32, #tpu.memory_space<vmem>>, vector<1x2x128xi32>
      %22 = vector.shape_cast %21 : vector<1x2x128xi32> to vector<2x128xi32>
      %c0_i32_8 = arith.constant 0 : i32
      %23 = vector.broadcast %c0_i32_8 : i32 to vector<2x128xi32>
      %24 = arith.cmpi eq, %22, %23 : vector<2x128xi32>
      %25 = arith.andi %20, %24 : vector<2x128xi1>
      %cst = arith.constant 1.000000e+00 : f32
      %cst_9 = arith.constant 0.000000e+00 : f32
      %26 = vector.broadcast %cst : f32 to vector<2x128xf32>
      %27 = vector.broadcast %cst_9 : f32 to vector<2x128xf32>
      %28 = arith.select %25, %26, %27 : vector<2x128xi1>, vector<2x128xf32>
      %c1_i32 = arith.constant 1 : i32
      %29 = vector.broadcast %c1_i32 : i32 to vector<2x128xi32>
      %30 = arith.cmpi eq, %22, %29 : vector<2x128xi32>
      %31 = arith.andi %20, %30 : vector<2x128xi1>
      %cst_10 = arith.constant 1.000000e+00 : f32
      %cst_11 = arith.constant 0.000000e+00 : f32
      %32 = vector.broadcast %cst_10 : f32 to vector<2x128xf32>
      %33 = vector.broadcast %cst_11 : f32 to vector<2x128xf32>
      %34 = arith.select %31, %32, %33 : vector<2x128xi1>, vector<2x128xf32>
      %c2_i32_12 = arith.constant 2 : i32
      %35 = vector.broadcast %c2_i32_12 : i32 to vector<2x128xi32>
      %36 = arith.cmpi eq, %22, %35 : vector<2x128xi32>
      %37 = arith.andi %20, %36 : vector<2x128xi1>
      %cst_13 = arith.constant 1.000000e+00 : f32
      %cst_14 = arith.constant 0.000000e+00 : f32
      %38 = vector.broadcast %cst_13 : f32 to vector<2x128xf32>
      %39 = vector.broadcast %cst_14 : f32 to vector<2x128xf32>
      %40 = arith.select %37, %38, %39 : vector<2x128xi1>, vector<2x128xf32>
      %c3_i32 = arith.constant 3 : i32
      %41 = vector.broadcast %c3_i32 : i32 to vector<2x128xi32>
      %42 = arith.cmpi eq, %22, %41 : vector<2x128xi32>
      %43 = arith.andi %20, %42 : vector<2x128xi1>
      %cst_15 = arith.constant 1.000000e+00 : f32
      %cst_16 = arith.constant 0.000000e+00 : f32
      %44 = vector.broadcast %cst_15 : f32 to vector<2x128xf32>
      %45 = vector.broadcast %cst_16 : f32 to vector<2x128xf32>
      %46 = arith.select %43, %44, %45 : vector<2x128xi1>, vector<2x128xf32>
      %c0_17 = arith.constant 0 : index
      %c0_18 = arith.constant 0 : index
      %c0_19 = arith.constant 0 : index
      %c0_20 = arith.constant 0 : index
      %47 = vector.load %arg3[%c0_17, %c0_18, %c0_19, %c0_20] : memref<1x4x2x128xf32, #tpu.memory_space<vmem>>, vector<1x1x2x128xf32>
      %48 = vector.shape_cast %47 : vector<1x1x2x128xf32> to vector<2x128xf32>
      %c0_21 = arith.constant 0 : index
      %c1 = arith.constant 1 : index
      %c0_22 = arith.constant 0 : index
      %c0_23 = arith.constant 0 : index
      %49 = vector.load %arg3[%c0_21, %c1, %c0_22, %c0_23] : memref<1x4x2x128xf32, #tpu.memory_space<vmem>>, vector<1x1x2x128xf32>
      %50 = vector.shape_cast %49 : vector<1x1x2x128xf32> to vector<2x128xf32>
      %c0_24 = arith.constant 0 : index
      %c2 = arith.constant 2 : index
      %c0_25 = arith.constant 0 : index
      %c0_26 = arith.constant 0 : index
      %51 = vector.load %arg3[%c0_24, %c2, %c0_25, %c0_26] : memref<1x4x2x128xf32, #tpu.memory_space<vmem>>, vector<1x1x2x128xf32>
      %52 = vector.shape_cast %51 : vector<1x1x2x128xf32> to vector<2x128xf32>
      %c0_27 = arith.constant 0 : index
      %c3 = arith.constant 3 : index
      %c0_28 = arith.constant 0 : index
      %c0_29 = arith.constant 0 : index
      %53 = vector.load %arg3[%c0_27, %c3, %c0_28, %c0_29] : memref<1x4x2x128xf32, #tpu.memory_space<vmem>>, vector<1x1x2x128xf32>
      %54 = vector.shape_cast %53 : vector<1x1x2x128xf32> to vector<2x128xf32>
      %55 = arith.maximumf %48, %50 : vector<2x128xf32>
      %56 = arith.maximumf %55, %52 : vector<2x128xf32>
      %57 = arith.maximumf %56, %54 : vector<2x128xf32>
      %58 = arith.subf %48, %57 : vector<2x128xf32>
      %59 = math.exp %58 : vector<2x128xf32>
      %60 = arith.subf %50, %57 : vector<2x128xf32>
      %61 = math.exp %60 : vector<2x128xf32>
      %62 = arith.subf %52, %57 : vector<2x128xf32>
      %63 = math.exp %62 : vector<2x128xf32>
      %64 = arith.subf %54, %57 : vector<2x128xf32>
      %65 = math.exp %64 : vector<2x128xf32>
      %66 = arith.addf %59, %61 : vector<2x128xf32>
      %67 = arith.addf %66, %63 : vector<2x128xf32>
      %68 = arith.addf %67, %65 : vector<2x128xf32>
      %cst_30 = arith.constant 1.000000e+00 : f32
      %69 = vector.broadcast %cst_30 : f32 to vector<2x128xf32>
      %70 = arith.divf %69, %68 : vector<2x128xf32>
      %cst_31 = arith.constant 0.000000e+00 : f32
      %71 = vector.broadcast %cst_31 : f32 to vector<2x128xf32>
      %72 = arith.select %20, %70, %71 : vector<2x128xi1>, vector<2x128xf32>
      %73 = arith.mulf %48, %28 : vector<2x128xf32>
      %74 = arith.mulf %50, %34 : vector<2x128xf32>
      %75 = arith.addf %73, %74 : vector<2x128xf32>
      %76 = arith.mulf %52, %40 : vector<2x128xf32>
      %77 = arith.addf %75, %76 : vector<2x128xf32>
      %78 = arith.mulf %54, %46 : vector<2x128xf32>
      %79 = arith.addf %77, %78 : vector<2x128xf32>
      %80 = math.log %68 : vector<2x128xf32>
      %81 = arith.addf %57, %80 : vector<2x128xf32>
      %82 = arith.subf %81, %79 : vector<2x128xf32>
      %cst_32 = arith.constant 0.000000e+00 : f32
      %83 = vector.broadcast %cst_32 : f32 to vector<2x128xf32>
      %84 = arith.select %20, %82, %83 : vector<2x128xi1>, vector<2x128xf32>
      %c0_33 = arith.constant 0 : index
      %c0_34 = arith.constant 0 : index
      %c0_35 = arith.constant 0 : index
      %c0_36 = arith.constant 0 : index
      %85 = vector.load %arg9[%c0_33, %c0_34, %c0_35, %c0_36] : memref<1x2x2x128xf32, #tpu.memory_space<vmem>>, vector<1x1x2x128xf32>
      %86 = vector.shape_cast %85 : vector<1x1x2x128xf32> to vector<2x128xf32>
      %87 = arith.addf %86, %84 : vector<2x128xf32>
      %c0_37 = arith.constant 0 : index
      %c0_38 = arith.constant 0 : index
      %c0_39 = arith.constant 0 : index
      %c0_40 = arith.constant 0 : index
      %88 = vector.load %arg9[%c0_37, %c0_38, %c0_39, %c0_40] : memref<1x2x2x128xf32, #tpu.memory_space<vmem>>, vector<1x1x2x128xf32>
      %89 = vector.shape_cast %88 : vector<1x1x2x128xf32> to vector<2x128xf32>
      %90 = vector.shape_cast %87 : vector<2x128xf32> to vector<1x1x2x128xf32>
      tpu.vector_store %arg9[%c0_37, %c0_38, %c0_39, %c0_40], %90 {strides = array<i32>} : memref<1x2x2x128xf32, #tpu.memory_space<vmem>>, vector<1x1x2x128xf32>,
      %91 = arith.mulf %59, %72 : vector<2x128xf32>
      %c0_41 = arith.constant 0 : index
      %c0_42 = arith.constant 0 : index
      %c0_43 = arith.constant 0 : index
      %c0_44 = arith.constant 0 : index
      %92 = vector.load %arg6[%c0_41, %c0_42, %c0_43, %c0_44] : memref<1x8x2x128xf32, #tpu.memory_space<vmem>>, vector<1x1x2x128xf32>
      %93 = vector.shape_cast %92 : vector<1x1x2x128xf32> to vector<2x128xf32>
      %94 = arith.mulf %91, %28 : vector<2x128xf32>
      %95 = arith.addf %93, %94 : vector<2x128xf32>
      %c0_45 = arith.constant 0 : index
      %c0_46 = arith.constant 0 : index
      %c0_47 = arith.constant 0 : index
      %c0_48 = arith.constant 0 : index
      %96 = vector.load %arg6[%c0_45, %c0_46, %c0_47, %c0_48] : memref<1x8x2x128xf32, #tpu.memory_space<vmem>>, vector<1x1x2x128xf32>
      %97 = vector.shape_cast %96 : vector<1x1x2x128xf32> to vector<2x128xf32>
      %98 = vector.shape_cast %95 : vector<2x128xf32> to vector<1x1x2x128xf32>
      tpu.vector_store %arg6[%c0_45, %c0_46, %c0_47, %c0_48], %98 {strides = array<i32>} : memref<1x8x2x128xf32, #tpu.memory_space<vmem>>, vector<1x1x2x128xf32>,
      %c0_49 = arith.constant 0 : index
      %c0_50 = arith.constant 0 : index
      %c0_51 = arith.constant 0 : index
      %c0_52 = arith.constant 0 : index
      %99 = vector.load %arg7[%c0_49, %c0_50, %c0_51, %c0_52] : memref<1x8x2x128xf32, #tpu.memory_space<vmem>>, vector<1x1x2x128xf32>
      %100 = vector.shape_cast %99 : vector<1x1x2x128xf32> to vector<2x128xf32>
      %101 = arith.mulf %91, %91 : vector<2x128xf32>
      %102 = arith.addf %100, %101 : vector<2x128xf32>
      %c0_53 = arith.constant 0 : index
      %c0_54 = arith.constant 0 : index
      %c0_55 = arith.constant 0 : index
      %c0_56 = arith.constant 0 : index
      %103 = vector.load %arg7[%c0_53, %c0_54, %c0_55, %c0_56] : memref<1x8x2x128xf32, #tpu.memory_space<vmem>>, vector<1x1x2x128xf32>
      %104 = vector.shape_cast %103 : vector<1x1x2x128xf32> to vector<2x128xf32>
      %105 = vector.shape_cast %102 : vector<2x128xf32> to vector<1x1x2x128xf32>
      tpu.vector_store %arg7[%c0_53, %c0_54, %c0_55, %c0_56], %105 {strides = array<i32>} : memref<1x8x2x128xf32, #tpu.memory_space<vmem>>, vector<1x1x2x128xf32>,
      %106 = arith.mulf %61, %72 : vector<2x128xf32>
      %c0_57 = arith.constant 0 : index
      %c1_58 = arith.constant 1 : index
      %c0_59 = arith.constant 0 : index
      %c0_60 = arith.constant 0 : index
      %107 = vector.load %arg6[%c0_57, %c1_58, %c0_59, %c0_60] : memref<1x8x2x128xf32, #tpu.memory_space<vmem>>, vector<1x1x2x128xf32>
      %108 = vector.shape_cast %107 : vector<1x1x2x128xf32> to vector<2x128xf32>
      %109 = arith.mulf %106, %34 : vector<2x128xf32>
      %110 = arith.addf %108, %109 : vector<2x128xf32>
      %c0_61 = arith.constant 0 : index
      %c1_62 = arith.constant 1 : index
      %c0_63 = arith.constant 0 : index
      %c0_64 = arith.constant 0 : index
      %111 = vector.load %arg6[%c0_61, %c1_62, %c0_63, %c0_64] : memref<1x8x2x128xf32, #tpu.memory_space<vmem>>, vector<1x1x2x128xf32>
      %112 = vector.shape_cast %111 : vector<1x1x2x128xf32> to vector<2x128xf32>
      %113 = vector.shape_cast %110 : vector<2x128xf32> to vector<1x1x2x128xf32>
      tpu.vector_store %arg6[%c0_61, %c1_62, %c0_63, %c0_64], %113 {strides = array<i32>} : memref<1x8x2x128xf32, #tpu.memory_space<vmem>>, vector<1x1x2x128xf32>,
      %c0_65 = arith.constant 0 : index
      %c1_66 = arith.constant 1 : index
      %c0_67 = arith.constant 0 : index
      %c0_68 = arith.constant 0 : index
      %114 = vector.load %arg7[%c0_65, %c1_66, %c0_67, %c0_68] : memref<1x8x2x128xf32, #tpu.memory_space<vmem>>, vector<1x1x2x128xf32>
      %115 = vector.shape_cast %114 : vector<1x1x2x128xf32> to vector<2x128xf32>
      %116 = arith.mulf %106, %106 : vector<2x128xf32>
      %117 = arith.addf %115, %116 : vector<2x128xf32>
      %c0_69 = arith.constant 0 : index
      %c1_70 = arith.constant 1 : index
      %c0_71 = arith.constant 0 : index
      %c0_72 = arith.constant 0 : index
      %118 = vector.load %arg7[%c0_69, %c1_70, %c0_71, %c0_72] : memref<1x8x2x128xf32, #tpu.memory_space<vmem>>, vector<1x1x2x128xf32>
      %119 = vector.shape_cast %118 : vector<1x1x2x128xf32> to vector<2x128xf32>
      %120 = vector.shape_cast %117 : vector<2x128xf32> to vector<1x1x2x128xf32>
      tpu.vector_store %arg7[%c0_69, %c1_70, %c0_71, %c0_72], %120 {strides = array<i32>} : memref<1x8x2x128xf32, #tpu.memory_space<vmem>>, vector<1x1x2x128xf32>,
      %121 = arith.mulf %63, %72 : vector<2x128xf32>
      %c0_73 = arith.constant 0 : index
      %c2_74 = arith.constant 2 : index
      %c0_75 = arith.constant 0 : index
      %c0_76 = arith.constant 0 : index
      %122 = vector.load %arg6[%c0_73, %c2_74, %c0_75, %c0_76] : memref<1x8x2x128xf32, #tpu.memory_space<vmem>>, vector<1x1x2x128xf32>
      %123 = vector.shape_cast %122 : vector<1x1x2x128xf32> to vector<2x128xf32>
      %124 = arith.mulf %121, %40 : vector<2x128xf32>
      %125 = arith.addf %123, %124 : vector<2x128xf32>
      %c0_77 = arith.constant 0 : index
      %c2_78 = arith.constant 2 : index
      %c0_79 = arith.constant 0 : index
      %c0_80 = arith.constant 0 : index
      %126 = vector.load %arg6[%c0_77, %c2_78, %c0_79, %c0_80] : memref<1x8x2x128xf32, #tpu.memory_space<vmem>>, vector<1x1x2x128xf32>
      %127 = vector.shape_cast %126 : vector<1x1x2x128xf32> to vector<2x128xf32>
      %128 = vector.shape_cast %125 : vector<2x128xf32> to vector<1x1x2x128xf32>
      tpu.vector_store %arg6[%c0_77, %c2_78, %c0_79, %c0_80], %128 {strides = array<i32>} : memref<1x8x2x128xf32, #tpu.memory_space<vmem>>, vector<1x1x2x128xf32>,
      %c0_81 = arith.constant 0 : index
      %c2_82 = arith.constant 2 : index
      %c0_83 = arith.constant 0 : index
      %c0_84 = arith.constant 0 : index
      %129 = vector.load %arg7[%c0_81, %c2_82, %c0_83, %c0_84] : memref<1x8x2x128xf32, #tpu.memory_space<vmem>>, vector<1x1x2x128xf32>
      %130 = vector.shape_cast %129 : vector<1x1x2x128xf32> to vector<2x128xf32>
      %131 = arith.mulf %121, %121 : vector<2x128xf32>
      %132 = arith.addf %130, %131 : vector<2x128xf32>
      %c0_85 = arith.constant 0 : index
      %c2_86 = arith.constant 2 : index
      %c0_87 = arith.constant 0 : index
      %c0_88 = arith.constant 0 : index
      %133 = vector.load %arg7[%c0_85, %c2_86, %c0_87, %c0_88] : memref<1x8x2x128xf32, #tpu.memory_space<vmem>>, vector<1x1x2x128xf32>
      %134 = vector.shape_cast %133 : vector<1x1x2x128xf32> to vector<2x128xf32>
      %135 = vector.shape_cast %132 : vector<2x128xf32> to vector<1x1x2x128xf32>
      tpu.vector_store %arg7[%c0_85, %c2_86, %c0_87, %c0_88], %135 {strides = array<i32>} : memref<1x8x2x128xf32, #tpu.memory_space<vmem>>, vector<1x1x2x128xf32>,
      %136 = arith.mulf %65, %72 : vector<2x128xf32>
      %c0_89 = arith.constant 0 : index
      %c3_90 = arith.constant 3 : index
      %c0_91 = arith.constant 0 : index
      %c0_92 = arith.constant 0 : index
      %137 = vector.load %arg6[%c0_89, %c3_90, %c0_91, %c0_92] : memref<1x8x2x128xf32, #tpu.memory_space<vmem>>, vector<1x1x2x128xf32>
      %138 = vector.shape_cast %137 : vector<1x1x2x128xf32> to vector<2x128xf32>
      %139 = arith.mulf %136, %46 : vector<2x128xf32>
      %140 = arith.addf %138, %139 : vector<2x128xf32>
      %c0_93 = arith.constant 0 : index
      %c3_94 = arith.constant 3 : index
      %c0_95 = arith.constant 0 : index
      %c0_96 = arith.constant 0 : index
      %141 = vector.load %arg6[%c0_93, %c3_94, %c0_95, %c0_96] : memref<1x8x2x128xf32, #tpu.memory_space<vmem>>, vector<1x1x2x128xf32>
      %142 = vector.shape_cast %141 : vector<1x1x2x128xf32> to vector<2x128xf32>
      %143 = vector.shape_cast %140 : vector<2x128xf32> to vector<1x1x2x128xf32>
      tpu.vector_store %arg6[%c0_93, %c3_94, %c0_95, %c0_96], %143 {strides = array<i32>} : memref<1x8x2x128xf32, #tpu.memory_space<vmem>>, vector<1x1x2x128xf32>,
      %c0_97 = arith.constant 0 : index
      %c3_98 = arith.constant 3 : index
      %c0_99 = arith.constant 0 : index
      %c0_100 = arith.constant 0 : index
      %144 = vector.load %arg7[%c0_97, %c3_98, %c0_99, %c0_100] : memref<1x8x2x128xf32, #tpu.memory_space<vmem>>, vector<1x1x2x128xf32>
      %145 = vector.shape_cast %144 : vector<1x1x2x128xf32> to vector<2x128xf32>
      %146 = arith.mulf %136, %136 : vector<2x128xf32>
      %147 = arith.addf %145, %146 : vector<2x128xf32>
      %c0_101 = arith.constant 0 : index
      %c3_102 = arith.constant 3 : index
      %c0_103 = arith.constant 0 : index
      %c0_104 = arith.constant 0 : index
      %148 = vector.load %arg7[%c0_101, %c3_102, %c0_103, %c0_104] : memref<1x8x2x128xf32, #tpu.memory_space<vmem>>, vector<1x1x2x128xf32>
      %149 = vector.shape_cast %148 : vector<1x1x2x128xf32> to vector<2x128xf32>
      %150 = vector.shape_cast %147 : vector<2x128xf32> to vector<1x1x2x128xf32>
      tpu.vector_store %arg7[%c0_101, %c3_102, %c0_103, %c0_104], %150 {strides = array<i32>} : memref<1x8x2x128xf32, #tpu.memory_space<vmem>>, vector<1x1x2x128xf32>,
      %c0_105 = arith.constant 0 : index
      %c0_106 = arith.constant 0 : index
      %c0_107 = arith.constant 0 : index
      %c0_108 = arith.constant 0 : index
      %151 = vector.load %arg4[%c0_105, %c0_106, %c0_107, %c0_108] : memref<1x4x2x128xf32, #tpu.memory_space<vmem>>, vector<1x1x2x128xf32>
      %152 = vector.shape_cast %151 : vector<1x1x2x128xf32> to vector<2x128xf32>
      %c0_109 = arith.constant 0 : index
      %c1_110 = arith.constant 1 : index
      %c0_111 = arith.constant 0 : index
      %c0_112 = arith.constant 0 : index
      %153 = vector.load %arg4[%c0_109, %c1_110, %c0_111, %c0_112] : memref<1x4x2x128xf32, #tpu.memory_space<vmem>>, vector<1x1x2x128xf32>
      %154 = vector.shape_cast %153 : vector<1x1x2x128xf32> to vector<2x128xf32>
      %c0_113 = arith.constant 0 : index
      %c2_114 = arith.constant 2 : index
      %c0_115 = arith.constant 0 : index
      %c0_116 = arith.constant 0 : index
      %155 = vector.load %arg4[%c0_113, %c2_114, %c0_115, %c0_116] : memref<1x4x2x128xf32, #tpu.memory_space<vmem>>, vector<1x1x2x128xf32>
      %156 = vector.shape_cast %155 : vector<1x1x2x128xf32> to vector<2x128xf32>
      %c0_117 = arith.constant 0 : index
      %c3_118 = arith.constant 3 : index
      %c0_119 = arith.constant 0 : index
      %c0_120 = arith.constant 0 : index
      %157 = vector.load %arg4[%c0_117, %c3_118, %c0_119, %c0_120] : memref<1x4x2x128xf32, #tpu.memory_space<vmem>>, vector<1x1x2x128xf32>
      %158 = vector.shape_cast %157 : vector<1x1x2x128xf32> to vector<2x128xf32>
      %159 = arith.maximumf %152, %154 : vector<2x128xf32>
      %160 = arith.maximumf %159, %156 : vector<2x128xf32>
      %161 = arith.maximumf %160, %158 : vector<2x128xf32>
      %162 = arith.subf %152, %161 : vector<2x128xf32>
      %163 = math.exp %162 : vector<2x128xf32>
      %164 = arith.subf %154, %161 : vector<2x128xf32>
      %165 = math.exp %164 : vector<2x128xf32>
      %166 = arith.subf %156, %161 : vector<2x128xf32>
      %167 = math.exp %166 : vector<2x128xf32>
      %168 = arith.subf %158, %161 : vector<2x128xf32>
      %169 = math.exp %168 : vector<2x128xf32>
      %170 = arith.addf %163, %165 : vector<2x128xf32>
      %171 = arith.addf %170, %167 : vector<2x128xf32>
      %172 = arith.addf %171, %169 : vector<2x128xf32>
      %cst_121 = arith.constant 1.000000e+00 : f32
      %173 = vector.broadcast %cst_121 : f32 to vector<2x128xf32>
      %174 = arith.divf %173, %172 : vector<2x128xf32>
      %cst_122 = arith.constant 0.000000e+00 : f32
      %175 = vector.broadcast %cst_122 : f32 to vector<2x128xf32>
      %176 = arith.select %20, %174, %175 : vector<2x128xi1>, vector<2x128xf32>
      %177 = arith.mulf %152, %28 : vector<2x128xf32>
      %178 = arith.mulf %154, %34 : vector<2x128xf32>
      %179 = arith.addf %177, %178 : vector<2x128xf32>
      %180 = arith.mulf %156, %40 : vector<2x128xf32>
      %181 = arith.addf %179, %180 : vector<2x128xf32>
      %182 = arith.mulf %158, %46 : vector<2x128xf32>
      %183 = arith.addf %181, %182 : vector<2x128xf32>
      %184 = math.log %172 : vector<2x128xf32>
      %185 = arith.addf %161, %184 : vector<2x128xf32>
      %186 = arith.subf %185, %183 : vector<2x128xf32>
      %cst_123 = arith.constant 0.000000e+00 : f32
      %187 = vector.broadcast %cst_123 : f32 to vector<2x128xf32>
      %188 = arith.select %20, %186, %187 : vector<2x128xi1>, vector<2x128xf32>
      %c0_124 = arith.constant 0 : index
      %c1_125 = arith.constant 1 : index
      %c0_126 = arith.constant 0 : index
      %c0_127 = arith.constant 0 : index
      %189 = vector.load %arg9[%c0_124, %c1_125, %c0_126, %c0_127] : memref<1x2x2x128xf32, #tpu.memory_space<vmem>>, vector<1x1x2x128xf32>
      %190 = vector.shape_cast %189 : vector<1x1x2x128xf32> to vector<2x128xf32>
      %191 = arith.addf %190, %188 : vector<2x128xf32>
      %c0_128 = arith.constant 0 : index
      %c1_129 = arith.constant 1 : index
      %c0_130 = arith.constant 0 : index
      %c0_131 = arith.constant 0 : index
      %192 = vector.load %arg9[%c0_128, %c1_129, %c0_130, %c0_131] : memref<1x2x2x128xf32, #tpu.memory_space<vmem>>, vector<1x1x2x128xf32>
      %193 = vector.shape_cast %192 : vector<1x1x2x128xf32> to vector<2x128xf32>
      %194 = vector.shape_cast %191 : vector<2x128xf32> to vector<1x1x2x128xf32>
      tpu.vector_store %arg9[%c0_128, %c1_129, %c0_130, %c0_131], %194 {strides = array<i32>} : memref<1x2x2x128xf32, #tpu.memory_space<vmem>>, vector<1x1x2x128xf32>,
      %195 = arith.mulf %163, %176 : vector<2x128xf32>
      %c0_132 = arith.constant 0 : index
      %c4 = arith.constant 4 : index
      %c0_133 = arith.constant 0 : index
      %c0_134 = arith.constant 0 : index
      %196 = vector.load %arg6[%c0_132, %c4, %c0_133, %c0_134] : memref<1x8x2x128xf32, #tpu.memory_space<vmem>>, vector<1x1x2x128xf32>
      %197 = vector.shape_cast %196 : vector<1x1x2x128xf32> to vector<2x128xf32>
      %198 = arith.mulf %195, %28 : vector<2x128xf32>
      %199 = arith.addf %197, %198 : vector<2x128xf32>
      %c0_135 = arith.constant 0 : index
      %c4_136 = arith.constant 4 : index
      %c0_137 = arith.constant 0 : index
      %c0_138 = arith.constant 0 : index
      %200 = vector.load %arg6[%c0_135, %c4_136, %c0_137, %c0_138] : memref<1x8x2x128xf32, #tpu.memory_space<vmem>>, vector<1x1x2x128xf32>
      %201 = vector.shape_cast %200 : vector<1x1x2x128xf32> to vector<2x128xf32>
      %202 = vector.shape_cast %199 : vector<2x128xf32> to vector<1x1x2x128xf32>
      tpu.vector_store %arg6[%c0_135, %c4_136, %c0_137, %c0_138], %202 {strides = array<i32>} : memref<1x8x2x128xf32, #tpu.memory_space<vmem>>, vector<1x1x2x128xf32>,
      %c0_139 = arith.constant 0 : index
      %c4_140 = arith.constant 4 : index
      %c0_141 = arith.constant 0 : index
      %c0_142 = arith.constant 0 : index
      %203 = vector.load %arg7[%c0_139, %c4_140, %c0_141, %c0_142] : memref<1x8x2x128xf32, #tpu.memory_space<vmem>>, vector<1x1x2x128xf32>
      %204 = vector.shape_cast %203 : vector<1x1x2x128xf32> to vector<2x128xf32>
      %205 = arith.mulf %195, %195 : vector<2x128xf32>
      %206 = arith.addf %204, %205 : vector<2x128xf32>
      %c0_143 = arith.constant 0 : index
      %c4_144 = arith.constant 4 : index
      %c0_145 = arith.constant 0 : index
      %c0_146 = arith.constant 0 : index
      %207 = vector.load %arg7[%c0_143, %c4_144, %c0_145, %c0_146] : memref<1x8x2x128xf32, #tpu.memory_space<vmem>>, vector<1x1x2x128xf32>
      %208 = vector.shape_cast %207 : vector<1x1x2x128xf32> to vector<2x128xf32>
      %209 = vector.shape_cast %206 : vector<2x128xf32> to vector<1x1x2x128xf32>
      tpu.vector_store %arg7[%c0_143, %c4_144, %c0_145, %c0_146], %209 {strides = array<i32>} : memref<1x8x2x128xf32, #tpu.memory_space<vmem>>, vector<1x1x2x128xf32>,
      %210 = arith.mulf %165, %176 : vector<2x128xf32>
      %c0_147 = arith.constant 0 : index
      %c5 = arith.constant 5 : index
      %c0_148 = arith.constant 0 : index
      %c0_149 = arith.constant 0 : index
      %211 = vector.load %arg6[%c0_147, %c5, %c0_148, %c0_149] : memref<1x8x2x128xf32, #tpu.memory_space<vmem>>, vector<1x1x2x128xf32>
      %212 = vector.shape_cast %211 : vector<1x1x2x128xf32> to vector<2x128xf32>
      %213 = arith.mulf %210, %34 : vector<2x128xf32>
      %214 = arith.addf %212, %213 : vector<2x128xf32>
      %c0_150 = arith.constant 0 : index
      %c5_151 = arith.constant 5 : index
      %c0_152 = arith.constant 0 : index
      %c0_153 = arith.constant 0 : index
      %215 = vector.load %arg6[%c0_150, %c5_151, %c0_152, %c0_153] : memref<1x8x2x128xf32, #tpu.memory_space<vmem>>, vector<1x1x2x128xf32>
      %216 = vector.shape_cast %215 : vector<1x1x2x128xf32> to vector<2x128xf32>
      %217 = vector.shape_cast %214 : vector<2x128xf32> to vector<1x1x2x128xf32>
      tpu.vector_store %arg6[%c0_150, %c5_151, %c0_152, %c0_153], %217 {strides = array<i32>} : memref<1x8x2x128xf32, #tpu.memory_space<vmem>>, vector<1x1x2x128xf32>,
      %c0_154 = arith.constant 0 : index
      %c5_155 = arith.constant 5 : index
      %c0_156 = arith.constant 0 : index
      %c0_157 = arith.constant 0 : index
      %218 = vector.load %arg7[%c0_154, %c5_155, %c0_156, %c0_157] : memref<1x8x2x128xf32, #tpu.memory_space<vmem>>, vector<1x1x2x128xf32>
      %219 = vector.shape_cast %218 : vector<1x1x2x128xf32> to vector<2x128xf32>
      %220 = arith.mulf %210, %210 : vector<2x128xf32>
      %221 = arith.addf %219, %220 : vector<2x128xf32>
      %c0_158 = arith.constant 0 : index
      %c5_159 = arith.constant 5 : index
      %c0_160 = arith.constant 0 : index
      %c0_161 = arith.constant 0 : index
      %222 = vector.load %arg7[%c0_158, %c5_159, %c0_160, %c0_161] : memref<1x8x2x128xf32, #tpu.memory_space<vmem>>, vector<1x1x2x128xf32>
      %223 = vector.shape_cast %222 : vector<1x1x2x128xf32> to vector<2x128xf32>
      %224 = vector.shape_cast %221 : vector<2x128xf32> to vector<1x1x2x128xf32>
      tpu.vector_store %arg7[%c0_158, %c5_159, %c0_160, %c0_161], %224 {strides = array<i32>} : memref<1x8x2x128xf32, #tpu.memory_space<vmem>>, vector<1x1x2x128xf32>,
      %225 = arith.mulf %167, %176 : vector<2x128xf32>
      %c0_162 = arith.constant 0 : index
      %c6 = arith.constant 6 : index
      %c0_163 = arith.constant 0 : index
      %c0_164 = arith.constant 0 : index
      %226 = vector.load %arg6[%c0_162, %c6, %c0_163, %c0_164] : memref<1x8x2x128xf32, #tpu.memory_space<vmem>>, vector<1x1x2x128xf32>
      %227 = vector.shape_cast %226 : vector<1x1x2x128xf32> to vector<2x128xf32>
      %228 = arith.mulf %225, %40 : vector<2x128xf32>
      %229 = arith.addf %227, %228 : vector<2x128xf32>
      %c0_165 = arith.constant 0 : index
      %c6_166 = arith.constant 6 : index
      %c0_167 = arith.constant 0 : index
      %c0_168 = arith.constant 0 : index
      %230 = vector.load %arg6[%c0_165, %c6_166, %c0_167, %c0_168] : memref<1x8x2x128xf32, #tpu.memory_space<vmem>>, vector<1x1x2x128xf32>
      %231 = vector.shape_cast %230 : vector<1x1x2x128xf32> to vector<2x128xf32>
      %232 = vector.shape_cast %229 : vector<2x128xf32> to vector<1x1x2x128xf32>
      tpu.vector_store %arg6[%c0_165, %c6_166, %c0_167, %c0_168], %232 {strides = array<i32>} : memref<1x8x2x128xf32, #tpu.memory_space<vmem>>, vector<1x1x2x128xf32>,
      %c0_169 = arith.constant 0 : index
      %c6_170 = arith.constant 6 : index
      %c0_171 = arith.constant 0 : index
      %c0_172 = arith.constant 0 : index
      %233 = vector.load %arg7[%c0_169, %c6_170, %c0_171, %c0_172] : memref<1x8x2x128xf32, #tpu.memory_space<vmem>>, vector<1x1x2x128xf32>
      %234 = vector.shape_cast %233 : vector<1x1x2x128xf32> to vector<2x128xf32>
      %235 = arith.mulf %225, %225 : vector<2x128xf32>
      %236 = arith.addf %234, %235 : vector<2x128xf32>
      %c0_173 = arith.constant 0 : index
      %c6_174 = arith.constant 6 : index
      %c0_175 = arith.constant 0 : index
      %c0_176 = arith.constant 0 : index
      %237 = vector.load %arg7[%c0_173, %c6_174, %c0_175, %c0_176] : memref<1x8x2x128xf32, #tpu.memory_space<vmem>>, vector<1x1x2x128xf32>
      %238 = vector.shape_cast %237 : vector<1x1x2x128xf32> to vector<2x128xf32>
      %239 = vector.shape_cast %236 : vector<2x128xf32> to vector<1x1x2x128xf32>
      tpu.vector_store %arg7[%c0_173, %c6_174, %c0_175, %c0_176], %239 {strides = array<i32>} : memref<1x8x2x128xf32, #tpu.memory_space<vmem>>, vector<1x1x2x128xf32>,
      %240 = arith.mulf %169, %176 : vector<2x128xf32>
      %c0_177 = arith.constant 0 : index
      %c7 = arith.constant 7 : index
      %c0_178 = arith.constant 0 : index
      %c0_179 = arith.constant 0 : index
      %241 = vector.load %arg6[%c0_177, %c7, %c0_178, %c0_179] : memref<1x8x2x128xf32, #tpu.memory_space<vmem>>, vector<1x1x2x128xf32>
      %242 = vector.shape_cast %241 : vector<1x1x2x128xf32> to vector<2x128xf32>
      %243 = arith.mulf %240, %46 : vector<2x128xf32>
      %244 = arith.addf %242, %243 : vector<2x128xf32>
      %c0_180 = arith.constant 0 : index
      %c7_181 = arith.constant 7 : index
      %c0_182 = arith.constant 0 : index
      %c0_183 = arith.constant 0 : index
      %245 = vector.load %arg6[%c0_180, %c7_181, %c0_182, %c0_183] : memref<1x8x2x128xf32, #tpu.memory_space<vmem>>, vector<1x1x2x128xf32>
      %246 = vector.shape_cast %245 : vector<1x1x2x128xf32> to vector<2x128xf32>
      %247 = vector.shape_cast %244 : vector<2x128xf32> to vector<1x1x2x128xf32>
      tpu.vector_store %arg6[%c0_180, %c7_181, %c0_182, %c0_183], %247 {strides = array<i32>} : memref<1x8x2x128xf32, #tpu.memory_space<vmem>>, vector<1x1x2x128xf32>,
      %c0_184 = arith.constant 0 : index
      %c7_185 = arith.constant 7 : index
      %c0_186 = arith.constant 0 : index
      %c0_187 = arith.constant 0 : index
      %248 = vector.load %arg7[%c0_184, %c7_185, %c0_186, %c0_187] : memref<1x8x2x128xf32, #tpu.memory_space<vmem>>, vector<1x1x2x128xf32>
      %249 = vector.shape_cast %248 : vector<1x1x2x128xf32> to vector<2x128xf32>
      %250 = arith.mulf %240, %240 : vector<2x128xf32>
      %251 = arith.addf %249, %250 : vector<2x128xf32>
      %c0_188 = arith.constant 0 : index
      %c7_189 = arith.constant 7 : index
      %c0_190 = arith.constant 0 : index
      %c0_191 = arith.constant 0 : index
      %252 = vector.load %arg7[%c0_188, %c7_189, %c0_190, %c0_191] : memref<1x8x2x128xf32, #tpu.memory_space<vmem>>, vector<1x1x2x128xf32>
      %253 = vector.shape_cast %252 : vector<1x1x2x128xf32> to vector<2x128xf32>
      %254 = vector.shape_cast %251 : vector<2x128xf32> to vector<1x1x2x128xf32>
      tpu.vector_store %arg7[%c0_188, %c7_189, %c0_190, %c0_191], %254 {strides = array<i32>} : memref<1x8x2x128xf32, #tpu.memory_space<vmem>>, vector<1x1x2x128xf32>,
      %c0_192 = arith.constant 0 : index
      %c0_193 = arith.constant 0 : index
      %c0_194 = arith.constant 0 : index
      %c0_195 = arith.constant 0 : index
      %255 = vector.load %arg8[%c0_192, %c0_193, %c0_194, %c0_195] : memref<1x4x2x128xf32, #tpu.memory_space<vmem>>, vector<1x1x2x128xf32>
      %256 = vector.shape_cast %255 : vector<1x1x2x128xf32> to vector<2x128xf32>
      %257 = arith.addf %256, %28 : vector<2x128xf32>
      %c0_196 = arith.constant 0 : index
      %c0_197 = arith.constant 0 : index
      %c0_198 = arith.constant 0 : index
      %c0_199 = arith.constant 0 : index
      %258 = vector.load %arg8[%c0_196, %c0_197, %c0_198, %c0_199] : memref<1x4x2x128xf32, #tpu.memory_space<vmem>>, vector<1x1x2x128xf32>
      %259 = vector.shape_cast %258 : vector<1x1x2x128xf32> to vector<2x128xf32>
      %260 = vector.shape_cast %257 : vector<2x128xf32> to vector<1x1x2x128xf32>
      tpu.vector_store %arg8[%c0_196, %c0_197, %c0_198, %c0_199], %260 {strides = array<i32>} : memref<1x4x2x128xf32, #tpu.memory_space<vmem>>, vector<1x1x2x128xf32>,
      %c0_200 = arith.constant 0 : index
      %c1_201 = arith.constant 1 : index
      %c0_202 = arith.constant 0 : index
      %c0_203 = arith.constant 0 : index
      %261 = vector.load %arg8[%c0_200, %c1_201, %c0_202, %c0_203] : memref<1x4x2x128xf32, #tpu.memory_space<vmem>>, vector<1x1x2x128xf32>
      %262 = vector.shape_cast %261 : vector<1x1x2x128xf32> to vector<2x128xf32>
      %263 = arith.addf %262, %34 : vector<2x128xf32>
      %c0_204 = arith.constant 0 : index
      %c1_205 = arith.constant 1 : index
      %c0_206 = arith.constant 0 : index
      %c0_207 = arith.constant 0 : index
      %264 = vector.load %arg8[%c0_204, %c1_205, %c0_206, %c0_207] : memref<1x4x2x128xf32, #tpu.memory_space<vmem>>, vector<1x1x2x128xf32>
      %265 = vector.shape_cast %264 : vector<1x1x2x128xf32> to vector<2x128xf32>
      %266 = vector.shape_cast %263 : vector<2x128xf32> to vector<1x1x2x128xf32>
      tpu.vector_store %arg8[%c0_204, %c1_205, %c0_206, %c0_207], %266 {strides = array<i32>} : memref<1x4x2x128xf32, #tpu.memory_space<vmem>>, vector<1x1x2x128xf32>,
      %c0_208 = arith.constant 0 : index
      %c2_209 = arith.constant 2 : index
      %c0_210 = arith.constant 0 : index
      %c0_211 = arith.constant 0 : index
      %267 = vector.load %arg8[%c0_208, %c2_209, %c0_210, %c0_211] : memref<1x4x2x128xf32, #tpu.memory_space<vmem>>, vector<1x1x2x128xf32>
      %268 = vector.shape_cast %267 : vector<1x1x2x128xf32> to vector<2x128xf32>
      %269 = arith.addf %268, %40 : vector<2x128xf32>
      %c0_212 = arith.constant 0 : index
      %c2_213 = arith.constant 2 : index
      %c0_214 = arith.constant 0 : index
      %c0_215 = arith.constant 0 : index
      %270 = vector.load %arg8[%c0_212, %c2_213, %c0_214, %c0_215] : memref<1x4x2x128xf32, #tpu.memory_space<vmem>>, vector<1x1x2x128xf32>
      %271 = vector.shape_cast %270 : vector<1x1x2x128xf32> to vector<2x128xf32>
      %272 = vector.shape_cast %269 : vector<2x128xf32> to vector<1x1x2x128xf32>
      tpu.vector_store %arg8[%c0_212, %c2_213, %c0_214, %c0_215], %272 {strides = array<i32>} : memref<1x4x2x128xf32, #tpu.memory_space<vmem>>, vector<1x1x2x128xf32>,
      %c0_216 = arith.constant 0 : index
      %c3_217 = arith.constant 3 : index
      %c0_218 = arith.constant 0 : index
      %c0_219 = arith.constant 0 : index
      %273 = vector.load %arg8[%c0_216, %c3_217, %c0_218, %c0_219] : memref<1x4x2x128xf32, #tpu.memory_space<vmem>>, vector<1x1x2x128xf32>
      %274 = vector.shape_cast %273 : vector<1x1x2x128xf32> to vector<2x128xf32>
      %275 = arith.addf %274, %46 : vector<2x128xf32>
      %c0_220 = arith.constant 0 : index
      %c3_221 = arith.constant 3 : index
      %c0_222 = arith.constant 0 : index
      %c0_223 = arith.constant 0 : index
      %276 = vector.load %arg8[%c0_220, %c3_221, %c0_222, %c0_223] : memref<1x4x2x128xf32, #tpu.memory_space<vmem>>, vector<1x1x2x128xf32>
      %277 = vector.shape_cast %276 : vector<1x1x2x128xf32> to vector<2x128xf32>
      %278 = vector.shape_cast %275 : vector<2x128xf32> to vector<1x1x2x128xf32>
      tpu.vector_store %arg8[%c0_220, %c3_221, %c0_222, %c0_223], %278 {strides = array<i32>} : memref<1x4x2x128xf32, #tpu.memory_space<vmem>>, vector<1x1x2x128xf32>,
    } else {
    }
    return
  }
  func.func @transform_0(%arg0: i32, %arg1: i32, %arg2: i32) -> (i32, i32, i32, i32) {
    %c2_i32 = arith.constant 2 : i32
    %0 = arith.muli %arg0, %c2_i32 : i32
    %1 = arith.addi %0, %arg1 : i32
    %c1_i32 = arith.constant 1 : i32
    %2 = arith.minsi %1, %c1_i32 : i32
    %c0_i32 = arith.constant 0 : i32
    %c0_i32_0 = arith.constant 0 : i32
    %c0_i32_1 = arith.constant 0 : i32
    return %2, %c0_i32, %arg2, %c0_i32_0 : i32, i32, i32, i32
  }
  func.func @transform_1(%arg0: i32, %arg1: i32, %arg2: i32) -> (i32, i32, i32, i32) {
    %c2_i32 = arith.constant 2 : i32
    %0 = arith.muli %arg0, %c2_i32 : i32
    %1 = arith.addi %0, %arg1 : i32
    %c1_i32 = arith.constant 1 : i32
    %2 = arith.minsi %1, %c1_i32 : i32
    %c0_i32 = arith.constant 0 : i32
    %c0_i32_0 = arith.constant 0 : i32
    %c0_i32_1 = arith.constant 0 : i32
    return %2, %c0_i32, %arg2, %c0_i32_0 : i32, i32, i32, i32
  }
  func.func @transform_2(%arg0: i32, %arg1: i32, %arg2: i32) -> (i32, i32, i32) {
    %c2_i32 = arith.constant 2 : i32
    %0 = arith.muli %arg0, %c2_i32 : i32
    %1 = arith.addi %0, %arg1 : i32
    %c1_i32 = arith.constant 1 : i32
    %2 = arith.minsi %1, %c1_i32 : i32
    %c0_i32 = arith.constant 0 : i32
    %c0_i32_0 = arith.constant 0 : i32
    return %2, %arg2, %c0_i32 : i32, i32, i32
  }
  func.func @transform_3(%arg0: i32, %arg1: i32, %arg2: i32) -> (i32, i32, i32, i32) {
    %c0_i32 = arith.constant 0 : i32
    %c0_i32_0 = arith.constant 0 : i32
    %c0_i32_1 = arith.constant 0 : i32
    %c0_i32_2 = arith.constant 0 : i32
    return %arg0, %c0_i32, %c0_i32_0, %c0_i32_1 : i32, i32, i32, i32
  }
  func.func @transform_4(%arg0: i32, %arg1: i32, %arg2: i32) -> (i32, i32, i32, i32) {
    %c0_i32 = arith.constant 0 : i32
    %c0_i32_0 = arith.constant 0 : i32
    %c0_i32_1 = arith.constant 0 : i32
    %c0_i32_2 = arith.constant 0 : i32
    return %arg0, %c0_i32, %c0_i32_0, %c0_i32_1 : i32, i32, i32, i32
  }
  func.func @transform_5(%arg0: i32, %arg1: i32, %arg2: i32) -> (i32, i32, i32, i32) {
    %c0_i32 = arith.constant 0 : i32
    %c0_i32_0 = arith.constant 0 : i32
    %c0_i32_1 = arith.constant 0 : i32
    %c0_i32_2 = arith.constant 0 : i32
    return %arg0, %c0_i32, %c0_i32_0, %c0_i32_1 : i32, i32, i32, i32
  }
  func.func @transform_6(%arg0: i32, %arg1: i32, %arg2: i32) -> (i32, i32, i32, i32) {
    %c0_i32 = arith.constant 0 : i32
    %c0_i32_0 = arith.constant 0 : i32
    %c0_i32_1 = arith.constant 0 : i32
    %c0_i32_2 = arith.constant 0 : i32
    return %arg0, %c0_i32, %c0_i32_0, %c0_i32_1 : i32, i32, i32, i32
  }
}

</mosaic_0001>

<llo_original>
// kernel: tpu_custom_call.1
$region0: #{tpu_custom_call.1}
  #allocation0 [shape = 'u32[]', space=smem, size = 0x4, offset = 0x4, fixed_abs, tag = 'smem constant byte address 0x4 - core index']
  #allocation1 [shape = 'u32[144,128]{1,0:T(1,128)}', space=vmem, size = 0x12000, scoped, tag = 'internal scratch']
  %s0 = inlined_call_operand.hbm [shape: f32[2,4,2,128], index: 0, kind: input, shape index: {}]
  %s1 = inlined_call_operand.hbm [shape: f32[2,4,2,128], index: 1, kind: input, shape index: {}]
  %s2 = inlined_call_operand.vmem [shape: s32[2,2,128], index: 2, kind: input, shape index: {}]
  %s3 = inlined_call_operand.hbm [shape: f32[1,8,2,128], index: 3, kind: output, shape index: {0}]
  %s4 = inlined_call_operand.hbm [shape: f32[1,8,2,128], index: 4, kind: output, shape index: {1}]
  %s5 = inlined_call_operand.hbm [shape: f32[1,4,2,128], index: 5, kind: output, shape index: {2}]
  %s6 = inlined_call_operand.hbm [shape: f32[1,2,2,128], index: 6, kind: output, shape index: {3}]
  %7 = xla_tuple %s3, %s4, %s5, %s6
  %s8 = sld [smem:[#allocation0]]
  $region85: #{tpu_custom_call.1} parent=0
    _
  %s10 = ssub.s32 1, %s8
  %s11 = scalar_select 0, %s10, %s8
  $region1: #{tpu_custom_call.1} parent=0
    #allocation2 [shape = 'u8[8192]{0}', space=vmem, size = 0x2000, scoped, tag = 'input window, operand 0']
    #allocation3 [shape = 's32[2]{0}', space=sflag, size = 0x8, scoped, tag = 'scoped memory for tpu_custom_call.1']
    #allocation4 [shape = 's32[2]{0}', space=sflag, size = 0x8, scoped, tag = 'scoped memory for tpu_custom_call.1']
    #allocation5 [shape = 'u8[8192]{0}', space=vmem, size = 0x2000, scoped, tag = 'input window, operand 1']
    #allocation6 [shape = 's32[2]{0}', space=sflag, size = 0x8, scoped, tag = 'scoped memory for tpu_custom_call.1']
    #allocation7 [shape = 'u8[8192]{0}', space=vmem, size = 0x2000, scoped, tag = 'output window, operand 0, single buffered']
    #allocation8 [shape = 'u8[8192]{0}', space=vmem, size = 0x2000, scoped, tag = 'output window, operand 1, single buffered']
    #allocation9 [shape = 's32[1]{0}', space=sflag, size = 0x4, scoped, tag = 'scoped memory for tpu_custom_call.1']
    #allocation10 [shape = 'u8[4096]{0}', space=vmem, size = 0x1000, scoped, tag = 'output window, operand 2, single buffered']
    #allocation11 [shape = 'u8[2048]{0}', space=vmem, size = 0x800, scoped, tag = 'output window, operand 3, single buffered']
    #allocation12 [shape = 's32[1]{0}', space=sflag, size = 0x4, scoped, tag = 'scoped memory for tpu_custom_call.1']
    %12 = vsyncpa [#allocation3], 0
    %s13 = scalar_lea.sflag [#allocation3], 1
    %14 = vsyncpa %s13, 0
    %15 = vsyncpa [#allocation6], 0
    %s16 = scalar_lea.sflag [#allocation6], 1
    %17 = vsyncpa %s16, 0
    %18 = vsyncpa [#allocation4], 0
    %19 = vsyncpa [#allocation9], 0
    %20 = vsyncpa [#allocation12], 0
    loop: start=0, step=1, limit=4
    $region2: #{tpu_custom_call.1} parent=1 // loop_pre_header
      _
    $region3: #{tpu_custom_call.1} parent=1 // loop_header
      %s22 = sphi 0, %s26
      %p23 = scmp.ge.s32.totalorder %s22, 4
      %s29 = sphi 0, %s48
      %s30 = sphi 0, %s44
      %s31 = sphi 0, %s40
      %s32 = sphi 0, %s29
      %s33 = sphi 0, %s30
      %s34 = sphi 0, %s31
      %s35 = sphi 0, %s32
      %s36 = sphi 0, %s33
      %s37 = sphi 0, %s34
      %s61 = sphi 0, %s63
      %s64 = sphi 0, %s61
      %s65 = sphi 0, %s64
      %s81 = sphi 0, %s65
      %s97 = sphi 0, %s99
      %s100 = sphi 0, %s97
      %s101 = sphi 0, %s100
      %s117 = sphi 0, %s101
      %s133 = sphi 0, %s135
      %s136 = sphi 0, %s133
      %s137 = sphi 0, %s136
      %s153 = sphi 0, %s137
      %s159 = sphi 0, %s161
      %s162 = sphi 0, %s159
      %s163 = sphi 0, %s162
      %s179 = sphi 0, %s163
      %s185 = sphi 0, %s187
      %s188 = sphi 0, %s185
      %s189 = sphi 0, %s188
      %s205 = sphi 0, %s189
      %s211 = sphi 0, %s213
      %s214 = sphi 0, %s211
      %s215 = sphi 0, %s214
      %s231 = sphi 0, %s215
      %s237 = sphi 0, %s239
      %s240 = sphi 0, %s237
      %s241 = sphi 0, %s240
      %s257 = sphi 0, %s241
    $region4: #{tpu_custom_call.1} parent=1 // loop_header_branch
      %25 = sbr.rel (%p23) target = $region8
    $region5: #{tpu_custom_call.1} parent=1 // loop_body
      %s27 = ssub.s32 %s22, 1
      %s28 = ssub.s32 %s22, 2
      %s38 = sadd.s32 1, %s31
      %p39 = scmp.ge.s32.totalorder %s38, 1
      %s40 = scalar_select %p39, 0, %s38
      %s41 = sadd.s32 1, %s30
      %s42 = scalar_select %p39, %s41, %s30
      %p43 = scmp.ge.s32.totalorder %s42, 2
      %s44 = scalar_select %p43, 0, %s42
      %s45 = sadd.s32 1, %s29
      %s46 = scalar_select %p43, %s45, %s29
      %p47 = scmp.ge.s32.totalorder %s46, 1
      %s48 = scalar_select %p47, 0, %s46
      %s49 = smul.u32 %s29, 2
      %s50 = sadd.s32 %s49, %s30
      %p51 = scmp.lt.s32.totalorder %s50, 1
      %s52 = scalar_select %p51, %s50, 1
      %s53 = smul.u32 %s48, 2
      %s54 = sadd.s32 %s53, %s44
      %p55 = scmp.lt.s32.totalorder %s54, 1
      %s56 = scalar_select %p55, %s54, 1
      %s57 = ssub.s32 %s52, %s56
      %s58 = ssub.s32 %s31, %s40
      %s59 = sor.u32 %s57, %s58
      %p60 = scmp.eq.s32.totalorder %s59, 0
      %s62 = sadd.s32 %s61, 1
      %s63 = scalar_select %p60, %s61, %s62
      %p66 = pneg %p60
      %p67 = scmp.eq.s32.totalorder %s22, 1
      %p68 = por %p66, %p67
      %p69 = scmp.ne.s32.totalorder %s61, %s64
      %p70 = scmp.eq.s32.totalorder %s22, 0
      %p71 = por %p69, %p70
      %p72 = scmp.ne.s32.totalorder %s61, %s64
      %p73 = scmp.eq.s32.totalorder %s27, 1
      %p74 = por %p72, %p73
      %p75 = scmp.ne.s32.totalorder %s64, %s65
      %p76 = scmp.eq.s32.totalorder %s27, 0
      %p77 = por %p75, %p76
      %p78 = scmp.ne.s32.totalorder %s64, %s65
      %p79 = scmp.eq.s32.totalorder %s28, 1
      %p80 = por %p78, %p79
      %p82 = scmp.ne.s32.totalorder %s65, %s81
      %p83 = scmp.eq.s32.totalorder %s28, 0
      %p84 = por %p82, %p83
      %s85 = smul.u32 %s29, 2
      %s86 = sadd.s32 %s85, %s30
      %p87 = scmp.lt.s32.totalorder %s86, 1
      %s88 = scalar_select %p87, %s86, 1
      %s89 = smul.u32 %s48, 2
      %s90 = sadd.s32 %s89, %s44
      %p91 = scmp.lt.s32.totalorder %s90, 1
      %s92 = scalar_select %p91, %s90, 1
      %s93 = ssub.s32 %s88, %s92
      %s94 = ssub.s32 %s31, %s40
      %s95 = sor.u32 %s93, %s94
      %p96 = scmp.eq.s32.totalorder %s95, 0
      %s98 = sadd.s32 %s97, 1
      %s99 = scalar_select %p96, %s97, %s98
      %p102 = pneg %p96
      %p103 = scmp.eq.s32.totalorder %s22, 1
      %p104 = por %p102, %p103
      %p105 = scmp.ne.s32.totalorder %s97, %s100
      %p106 = scmp.eq.s32.totalorder %s22, 0
      %p107 = por %p105, %p106
      %p108 = scmp.ne.s32.totalorder %s97, %s100
      %p109 = scmp.eq.s32.totalorder %s27, 1
      %p110 = por %p108, %p109
      %p111 = scmp.ne.s32.totalorder %s100, %s101
      %p112 = scmp.eq.s32.totalorder %s27, 0
      %p113 = por %p111, %p112
      %p114 = scmp.ne.s32.totalorder %s100, %s101
      %p115 = scmp.eq.s32.totalorder %s28, 1
      %p116 = por %p114, %p115
      %p118 = scmp.ne.s32.totalorder %s101, %s117
      %p119 = scmp.eq.s32.totalorder %s28, 0
      %p120 = por %p118, %p119
      %s121 = smul.u32 %s29, 2
      %s122 = sadd.s32 %s121, %s30
      %p123 = scmp.lt.s32.totalorder %s122, 1
      %s124 = scalar_select %p123, %s122, 1
      %s125 = smul.u32 %s48, 2
      %s126 = sadd.s32 %s125, %s44
      %p127 = scmp.lt.s32.totalorder %s126, 1
      %s128 = scalar_select %p127, %s126, 1
      %s129 = ssub.s32 %s124, %s128
      %s130 = ssub.s32 %s31, %s40
      %s131 = sor.u32 %s129, %s130
      %p132 = scmp.eq.s32.totalorder %s131, 0
      %s134 = sadd.s32 %s133, 1
      %s135 = scalar_select %p132, %s133, %s134
      %p138 = pneg %p132
      %p139 = scmp.eq.s32.totalorder %s22, 1
      %p140 = por %p138, %p139
      %p141 = scmp.ne.s32.totalorder %s133, %s136
      %p142 = scmp.eq.s32.totalorder %s22, 0
      %p143 = por %p141, %p142
      %p144 = scmp.ne.s32.totalorder %s133, %s136
      %p145 = scmp.eq.s32.totalorder %s27, 1
      %p146 = por %p144, %p145
      %p147 = scmp.ne.s32.totalorder %s136, %s137
      %p148 = scmp.eq.s32.totalorder %s27, 0
      %p149 = por %p147, %p148
      %p150 = scmp.ne.s32.totalorder %s136, %s137
      %p151 = scmp.eq.s32.totalorder %s28, 1
      %p152 = por %p150, %p151
      %p154 = scmp.ne.s32.totalorder %s137, %s153
      %p155 = scmp.eq.s32.totalorder %s28, 0
      %p156 = por %p154, %p155
      %s157 = ssub.s32 %s29, %s48
      %p158 = scmp.eq.s32.totalorder %s157, 0
      %s160 = sadd.s32 %s159, 1
      %s161 = scalar_select %p158, %s159, %s160
      %p164 = pneg %p158
      %p165 = scmp.eq.s32.totalorder %s22, 1
      %p166 = por %p164, %p165
      %p167 = scmp.ne.s32.totalorder %s159, %s162
      %p168 = scmp.eq.s32.totalorder %s22, 0
      %p169 = por %p167, %p168
      %p170 = scmp.ne.s32.totalorder %s159, %s162
      %p171 = scmp.eq.s32.totalorder %s27, 1
      %p172 = por %p170, %p171
      %p173 = scmp.ne.s32.totalorder %s162, %s163
      %p174 = scmp.eq.s32.totalorder %s27, 0
      %p175 = por %p173, %p174
      %p176 = scmp.ne.s32.totalorder %s162, %s163
      %p177 = scmp.eq.s32.totalorder %s28, 1
      %p178 = por %p176, %p177
      %p180 = scmp.ne.s32.totalorder %s163, %s179
      %p181 = scmp.eq.s32.totalorder %s28, 0
      %p182 = por %p180, %p181
      %s183 = ssub.s32 %s29, %s48
      %p184 = scmp.eq.s32.totalorder %s183, 0
      %s186 = sadd.s32 %s185, 1
      %s187 = scalar_select %p184, %s185, %s186
      %p190 = pneg %p184
      %p191 = scmp.eq.s32.totalorder %s22, 1
      %p192 = por %p190, %p191
      %p193 = scmp.ne.s32.totalorder %s185, %s188
      %p194 = scmp.eq.s32.totalorder %s22, 0
      %p195 = por %p193, %p194
      %p196 = scmp.ne.s32.totalorder %s185, %s188
      %p197 = scmp.eq.s32.totalorder %s27, 1
      %p198 = por %p196, %p197
      %p199 = scmp.ne.s32.totalorder %s188, %s189
      %p200 = scmp.eq.s32.totalorder %s27, 0
      %p201 = por %p199, %p200
      %p202 = scmp.ne.s32.totalorder %s188, %s189
      %p203 = scmp.eq.s32.totalorder %s28, 1
      %p204 = por %p202, %p203
      %p206 = scmp.ne.s32.totalorder %s189, %s205
      %p207 = scmp.eq.s32.totalorder %s28, 0
      %p208 = por %p206, %p207
      %s209 = ssub.s32 %s29, %s48
      %p210 = scmp.eq.s32.totalorder %s209, 0
      %s212 = sadd.s32 %s211, 1
      %s213 = scalar_select %p210, %s211, %s212
      %p216 = pneg %p210
      %p217 = scmp.eq.s32.totalorder %s22, 1
      %p218 = por %p216, %p217
      %p219 = scmp.ne.s32.totalorder %s211, %s214
      %p220 = scmp.eq.s32.totalorder %s22, 0
      %p221 = por %p219, %p220
      %p222 = scmp.ne.s32.totalorder %s211, %s214
      %p223 = scmp.eq.s32.totalorder %s27, 1
      %p224 = por %p222, %p223
      %p225 = scmp.ne.s32.totalorder %s214, %s215
      %p226 = scmp.eq.s32.totalorder %s27, 0
      %p227 = por %p225, %p226
      %p228 = scmp.ne.s32.totalorder %s214, %s215
      %p229 = scmp.eq.s32.totalorder %s28, 1
      %p230 = por %p228, %p229
      %p232 = scmp.ne.s32.totalorder %s215, %s231
      %p233 = scmp.eq.s32.totalorder %s28, 0
      %p234 = por %p232, %p233
      %s235 = ssub.s32 %s29, %s48
      %p236 = scmp.eq.s32.totalorder %s235, 0
      %s238 = sadd.s32 %s237, 1
      %s239 = scalar_select %p236, %s237, %s238
      %p242 = pneg %p236
      %p243 = scmp.eq.s32.totalorder %s22, 1
      %p244 = por %p242, %p243
      %p245 = scmp.ne.s32.totalorder %s237, %s240
      %p246 = scmp.eq.s32.totalorder %s22, 0
      %p247 = por %p245, %p246
      %p248 = scmp.ne.s32.totalorder %s237, %s240
      %p249 = scmp.eq.s32.totalorder %s27, 1
      %p250 = por %p248, %p249
      %p251 = scmp.ne.s32.totalorder %s240, %s241
      %p252 = scmp.eq.s32.totalorder %s27, 0
      %p253 = por %p251, %p252
      %p254 = scmp.ne.s32.totalorder %s240, %s241
      %p255 = scmp.eq.s32.totalorder %s28, 1
      %p256 = por %p254, %p255
      %p258 = scmp.ne.s32.totalorder %s241, %s257
      %p259 = scmp.eq.s32.totalorder %s28, 0
      %p260 = por %p258, %p259
      %p261 = scmp.le.s32.totalorder 1, %s22
      %p262 = scmp.lt.s32.totalorder %s22, 3
      %p263 = pnand %p261, %p262
      %p264 = pneg %p263
      // Predicated region
      $region9: #{tpu_custom_call.1} parent=5 // pred_check
        _
      $region10: #{tpu_custom_call.1} parent=5 // pred_check_branch
        %266 = sbr.rel (%p263) target = $region12
      $region11: #{tpu_custom_call.1} parent=5 // pred_region
        %s267 = ssub.s32 %s22, 1
      $region12: #{tpu_custom_call.1} parent=5 // pred_fallthru
        _
      %p268 = scmp.lt.s32.totalorder %s22, 2
      // Predicated region
      $region13: #{tpu_custom_call.1} parent=5 // pred_check
        %p269 = pneg %p268
      $region14: #{tpu_custom_call.1} parent=5 // pred_check_branch
        %271 = sbr.rel (%p269) target = $region16
      $region15: #{tpu_custom_call.1} parent=5 // pred_region
        // Predicated region
        $region17: #{tpu_custom_call.1} parent=15 // pred_check
          %p272 = pneg %p71
        $region18: #{tpu_custom_call.1} parent=15 // pred_check_branch
          %274 = sbr.rel (%p272) target = $region20
        $region19: #{tpu_custom_call.1} parent=15 // pred_region
          %s275 = sand.u32 %s61, 1
          %s276 = scalar_lea.sflag [#allocation3], %s275
          %s277 = sand.u32 %s61, 1
          %s278 = smul.addr %s277, 8
          %s279 = scalar_lea.vmem [#allocation2], %s278
          %s280 = smul.u32 %s29, 2
          %s281 = sadd.s32 %s280, %s30
          %p282 = scmp.lt.s32.totalorder %s281, 1
          %s283 = scalar_select %p282, %s281, 1
          %s285 = ssub.s32 128, 128
          %286 = vsyncadd %s276, %s285
          %s287 = smul.addr %s283, 4
          %s288 = sadd.s32 %s31, %s287
          %s289 = smul.addr %s288, 32
          %s290 = scalar_lea.hbm %s0, %s289
          %s291 = sshll.u32 %s279, 4
          %s292 = int_to_ptr.vmem [resolvable:$true] %s291
          %297 = dma.hbm_to_vmem [thread:$0]  %s290, 128, %s292, %s276, 32, 32, 2
        $region20: #{tpu_custom_call.1} parent=15 // pred_fallthru
          _
        // Predicated region
        $region21: #{tpu_custom_call.1} parent=15 // pred_check
          %p298 = pneg %p107
        $region22: #{tpu_custom_call.1} parent=15 // pred_check_branch
          %300 = sbr.rel (%p298) target = $region24
        $region23: #{tpu_custom_call.1} parent=15 // pred_region
          %s301 = sand.u32 %s97, 1
          %s302 = scalar_lea.sflag [#allocation6], %s301
          %s303 = sand.u32 %s97, 1
          %s304 = smul.addr %s303, 8
          %s305 = scalar_lea.vmem [#allocation5], %s304
          %s306 = smul.u32 %s29, 2
          %s307 = sadd.s32 %s306, %s30
          %p308 = scmp.lt.s32.totalorder %s307, 1
          %s309 = scalar_select %p308, %s307, 1
          %s311 = ssub.s32 128, 128
          %312 = vsyncadd %s302, %s311
          %s313 = smul.addr %s309, 4
          %s314 = sadd.s32 %s31, %s313
          %s315 = smul.addr %s314, 32
          %s316 = scalar_lea.hbm %s1, %s315
          %s317 = sshll.u32 %s305, 4
          %s318 = int_to_ptr.vmem [resolvable:$true] %s317
          %323 = dma.hbm_to_vmem [thread:$0]  %s316, 128, %s318, %s302, 32, 32, 2
        $region24: #{tpu_custom_call.1} parent=15 // pred_fallthru
          _
        // Predicated region
        $region25: #{tpu_custom_call.1} parent=15 // pred_check
          %p324 = pneg %p143
        $region26: #{tpu_custom_call.1} parent=15 // pred_check_branch
          %326 = sbr.rel (%p324) target = $region28
        $region27: #{tpu_custom_call.1} parent=15 // pred_region
          %s327 = smul.u32 %s29, 2
          %s328 = sadd.s32 %s327, %s30
          %p329 = scmp.lt.s32.totalorder %s328, 1
          %s330 = scalar_select %p329, %s328, 1
          %p331 = scmp.lt.s32.totalorder %s330, 1
          %s332 = scalar_select %p331, %s330, 1
          %p333 = scmp.lt.s32.totalorder %s31, 0
          %s334 = scalar_select %p333, %s31, 0
          %s335 = sadd.s32 %s334, %s332
          %s336 = smul.addr %s335, 2
          %s337 = scalar_lea.vmem %s2, %s336
          %s338 = smul.u32 %s29, 2
          %s339 = sadd.s32 %s338, %s30
          %p340 = scmp.lt.s32.totalorder %s339, 1
          %s341 = scalar_select %p340, %s339, 1
        $region28: #{tpu_custom_call.1} parent=15 // pred_fallthru
          _
      $region16: #{tpu_custom_call.1} parent=5 // pred_fallthru
        _
      %p342 = scmp.le.s32.totalorder 1, %s22
      %p343 = scmp.lt.s32.totalorder %s22, 3
      %p344 = pnand %p342, %p343
      %p345 = pneg %p344
      // Predicated region
      $region29: #{tpu_custom_call.1} parent=5 // pred_check
        _
      $region30: #{tpu_custom_call.1} parent=5 // pred_check_branch
        %347 = sbr.rel (%p344) target = $region32
      $region31: #{tpu_custom_call.1} parent=5 // pred_region
        %s348 = ssub.s32 %s22, 1
        %s349 = sand.u32 %s64, 1
        %s350 = scalar_lea.sflag [#allocation3], %s349
        %s351 = sand.u32 %s64, 1
        %s352 = smul.addr %s351, 8
        %s353 = scalar_lea.vmem [#allocation2], %s352
        // Predicated region
        $region33: #{tpu_custom_call.1} parent=31 // pred_check
          %p354 = pneg %p77
        $region34: #{tpu_custom_call.1} parent=31 // pred_check_branch
          %356 = sbr.rel (%p354) target = $region36
        $region35: #{tpu_custom_call.1} parent=31 // pred_region
          %357 = dma.done %s350, 128
        $region36: #{tpu_custom_call.1} parent=31 // pred_fallthru
          _
        %s358 = sand.u32 %s100, 1
        %s359 = scalar_lea.sflag [#allocation6], %s358
        %s360 = sand.u32 %s100, 1
        %s361 = smul.addr %s360, 8
        %s362 = scalar_lea.vmem [#allocation5], %s361
        // Predicated region
        $region37: #{tpu_custom_call.1} parent=31 // pred_check
          %p363 = pneg %p113
        $region38: #{tpu_custom_call.1} parent=31 // pred_check_branch
          %365 = sbr.rel (%p363) target = $region40
        $region39: #{tpu_custom_call.1} parent=31 // pred_region
          %366 = dma.done %s359, 128
        $region40: #{tpu_custom_call.1} parent=31 // pred_fallthru
          _
        %s367 = sand.u32 %s64, 1
        %s368 = scalar_lea.sflag [#allocation3], %s367
        %s369 = sand.u32 %s64, 1
        %s370 = smul.addr %s369, 8
        %s371 = scalar_lea.vmem [#allocation2], %s370
        %p372 = pneg %p77
        %p373 = pneg %p74
        %s374 = sand.u32 %s100, 1
        %s375 = scalar_lea.sflag [#allocation6], %s374
        %s376 = sand.u32 %s100, 1
        %s377 = smul.addr %s376, 8
        %s378 = scalar_lea.vmem [#allocation5], %s377
        %p379 = pneg %p113
        %p380 = pneg %p110
        %s381 = smul.u32 %s32, 2
        %s382 = sadd.s32 %s381, %s33
        %p383 = scmp.lt.s32.totalorder %s382, 1
        %s384 = scalar_select %p383, %s382, 1
        %p385 = scmp.lt.s32.totalorder %s384, 1
        %s386 = scalar_select %p385, %s384, 1
        %p387 = scmp.lt.s32.totalorder %s34, 0
        %s388 = scalar_select %p387, %s34, 0
        %s389 = sadd.s32 %s388, %s386
        %s390 = smul.addr %s389, 2
        %s391 = scalar_lea.vmem %s2, %s390
        %p392 = pneg %p149
        %p393 = pneg %p146
        %p394 = pneg %p175
        %p395 = pneg %p172
        %p396 = pneg %p201
        %p397 = pneg %p198
        %p398 = pneg %p227
        %p399 = pneg %p224
        %p400 = pneg %p253
        %p401 = pneg %p250
        %s402 = smul.u32 %s32, 2
        %s403 = sadd.s32 %s402, %s33
        %p404 = scmp.lt.s32.totalorder %s403, 1
        %s405 = scalar_select %p404, %s403, 1
        %s406 = smul.u32 %s32, 2
        %s407 = sadd.s32 %s406, %s33
        %p408 = scmp.lt.s32.totalorder %s407, 1
        %s409 = scalar_select %p408, %s407, 1
        %s410 = smul.u32 %s32, 2
        %s411 = sadd.s32 %s410, %s33
        %p412 = scmp.lt.s32.totalorder %s411, 1
        %s413 = scalar_select %p412, %s411, 1
        %p414 = scmp.lt.s32.totalorder %s413, 1
        %s415 = scalar_select %p414, %s413, 1
        %p416 = scmp.lt.s32.totalorder %s34, 0
        %s417 = scalar_select %p416, %s34, 0
        %s418 = sadd.s32 %s417, %s415
        %s419 = smul.addr %s418, 2
        %s420 = scalar_lea.vmem %s2, %s419
        %s421 = smul.u32 %s32, 2
        %s422 = sadd.s32 %s421, %s33
        %p423 = scmp.lt.s32.totalorder %s422, 1
        %s424 = scalar_select %p423, %s422, 1
        %p425 = scmp.eq.s32.totalorder %s33, 0
        %p426 = scmp.eq.s32.totalorder %s34, 0
        %p427 = pnand %p425, %p426
        %p428 = pneg %p427
        // Predicated region
        $region41: #{tpu_custom_call.1} parent=31 // pred_check
          _
        $region42: #{tpu_custom_call.1} parent=31 // pred_check_branch
          %430 = sbr.rel (%p427) target = $region44
        $region43: #{tpu_custom_call.1} parent=31 // pred_region
          %431 = vst [vmem:[#allocation7] sm:$0x3] 0.0
          %432 = vst [vmem:[#allocation7 + $0x2] sm:$0x3] 0.0
          %433 = vst [vmem:[#allocation7 + $0x4] sm:$0x3] 0.0
          %434 = vst [vmem:[#allocation7 + $0x6] sm:$0x3] 0.0
          %435 = vst [vmem:[#allocation7 + $0x8] sm:$0x3] 0.0
          %436 = vst [vmem:[#allocation7 + $0xa] sm:$0x3] 0.0
          %437 = vst [vmem:[#allocation7 + $0xc] sm:$0x3] 0.0
          %438 = vst [vmem:[#allocation7 + $0xe] sm:$0x3] 0.0
          %439 = vst [vmem:[#allocation8] sm:$0x3] 0.0
          %440 = vst [vmem:[#allocation8 + $0x2] sm:$0x3] 0.0
          %441 = vst [vmem:[#allocation8 + $0x4] sm:$0x3] 0.0
          %442 = vst [vmem:[#allocation8 + $0x6] sm:$0x3] 0.0
          %443 = vst [vmem:[#allocation8 + $0x8] sm:$0x3] 0.0
          %444 = vst [vmem:[#allocation8 + $0xa] sm:$0x3] 0.0
          %445 = vst [vmem:[#allocation8 + $0xc] sm:$0x3] 0.0
          %446 = vst [vmem:[#allocation8 + $0xe] sm:$0x3] 0.0
          %447 = vst [vmem:[#allocation10] sm:$0x3] 0.0
          %448 = vst [vmem:[#allocation10 + $0x2] sm:$0x3] 0.0
          %449 = vst [vmem:[#allocation10 + $0x4] sm:$0x3] 0.0
          %450 = vst [vmem:[#allocation10 + $0x6] sm:$0x3] 0.0
          %451 = vst [vmem:[#allocation11] sm:$0x3] 0.0
          %452 = vst [vmem:[#allocation11 + $0x2] sm:$0x3] 0.0
        $region44: #{tpu_custom_call.1} parent=31 // pred_fallthru
          _
        %s453 = smul.u32 %s32, 2
        %s454 = sadd.s32 %s453, %s33
        %p455 = scmp.lt.s32.totalorder %s454, 2
        // Predicated region
        $region45: #{tpu_custom_call.1} parent=31 // pred_check
          %p456 = pneg %p455
        $region46: #{tpu_custom_call.1} parent=31 // pred_check_branch
          %458 = sbr.rel (%p456) target = $region48
        $region47: #{tpu_custom_call.1} parent=31 // pred_region
          %s459 = smul.u32 %s34, 256
          %v460 = vlaneseq
          %v461 = vshrl.u32 %v460, 7
          %v462 = vlaneseq
          %v463 = vand.u32 %v462, 127
          %v464 = vmul.u32 %v461, 128
          %v465 = vstv %s459
          %v466 = vadd.s32 %v465, %v464
          %v467 = vadd.s32 %v466, %v463
          %vm468 = vcmp.lt.s32.totalorder %v467, 256
          %v469 = vld [vmem:[%s420] sm:$0x3]
          %vm470 = vcmp.eq.s32.totalorder %v469, 0
          %vm471 = vmand %vm468, %vm470
          %v472 = vsel %vm471, 1.0, 0.0
          %vm473 = vcmp.eq.s32.totalorder %v469, 1
          %vm474 = vmand %vm468, %vm473
          %v475 = vsel %vm474, 1.0, 0.0
          %vm476 = vcmp.eq.s32.totalorder %v469, 2
          %vm477 = vmand %vm468, %vm476
          %v478 = vsel %vm477, 1.0, 0.0
          %vm479 = vcmp.eq.s32.totalorder %v469, 3
          %vm480 = vmand %vm468, %vm479
          %v481 = vsel %vm480, 1.0, 0.0
          %v482 = vld [vmem:[%s353] sm:$0x3]
          %s483 = scalar_lea.vmem %s353, 2 [#allocation2]
          %v484 = vld [vmem:[%s483] sm:$0x3]
          %s485 = scalar_lea.vmem %s353, 4 [#allocation2]
          %v486 = vld [vmem:[%s485] sm:$0x3]
          %s487 = scalar_lea.vmem %s353, 6 [#allocation2]
          %v488 = vld [vmem:[%s487] sm:$0x3]
          %v489 = vmax.f32 %v482, %v484
          %v490 = vmax.f32 %v489, %v486
          %v491 = vmax.f32 %v490, %v488
          %v492 = vsub.f32 %v482, %v491
          %v493 = vmul.f32 %v492, 1.442695
          %v494 = vpow.pop %v493
          %v495 = vsub.f32 %v484, %v491
          %v496 = vmul.f32 %v495, 1.442695
          %v497 = vpow.pop %v496
          %v498 = vsub.f32 %v486, %v491
          %v499 = vmul.f32 %v498, 1.442695
          %v500 = vpow.pop %v499
          %v501 = vsub.f32 %v488, %v491
          %v502 = vmul.f32 %v501, 1.442695
          %v503 = vpow.pop %v502
          %v504 = vadd.f32 %v494, %v497
          %v505 = vadd.f32 %v504, %v500
          %v506 = vadd.f32 %v505, %v503
          %v507 = vrcp.pop %v506
          %v508 = vmul.f32 1.0, %v507
          %v509 = vsel %vm468, %v508, 0.0
          %v510 = vmul.f32 %v482, %v472
          %v511 = vmul.f32 %v484, %v475
          %v512 = vadd.f32 %v510, %v511
          %v513 = vmul.f32 %v486, %v478
          %v514 = vadd.f32 %v512, %v513
          %v515 = vmul.f32 %v488, %v481
          %v516 = vadd.f32 %v514, %v515
          %v517 = vlog2.pop %v506
          %v518 = vmul.f32 %v517, 0.6931472
          %v519 = vadd.f32 %v491, %v518
          %v520 = vsub.f32 %v519, %v516
          %v521 = vsel %vm468, %v520, 0.0
          %v522 = vld [vmem:[#allocation11] sm:$0x3]
          %v523 = vadd.f32 %v522, %v521
          %524 = vst [vmem:[#allocation11] sm:$0x3] %v523
          %v525 = vmul.f32 %v494, %v509
          %v526 = vld [vmem:[#allocation7] sm:$0x3]
          %v527 = vmul.f32 %v525, %v472
          %v528 = vadd.f32 %v526, %v527
          %529 = vst [vmem:[#allocation7] sm:$0x3] %v528
          %v530 = vld [vmem:[#allocation8] sm:$0x3]
          %v531 = vmul.f32 %v525, %v525
          %v532 = vadd.f32 %v530, %v531
          %533 = vst [vmem:[#allocation8] sm:$0x3] %v532
          %v534 = vmul.f32 %v497, %v509
          %s535 = scalar_lea.vmem [#allocation7], 2
          %v536 = vld [vmem:[%s535] sm:$0x3]
          %v537 = vmul.f32 %v534, %v475
          %v538 = vadd.f32 %v536, %v537
          %539 = vst [vmem:[%s535] sm:$0x3] %v538
          %s540 = scalar_lea.vmem [#allocation8], 2
          %v541 = vld [vmem:[%s540] sm:$0x3]
          %v542 = vmul.f32 %v534, %v534
          %v543 = vadd.f32 %v541, %v542
          %544 = vst [vmem:[%s540] sm:$0x3] %v543
          %v545 = vmul.f32 %v500, %v509
          %s546 = scalar_lea.vmem [#allocation7], 4
          %v547 = vld [vmem:[%s546] sm:$0x3]
          %v548 = vmul.f32 %v545, %v478
          %v549 = vadd.f32 %v547, %v548
          %550 = vst [vmem:[%s546] sm:$0x3] %v549
          %s551 = scalar_lea.vmem [#allocation8], 4
          %v552 = vld [vmem:[%s551] sm:$0x3]
          %v553 = vmul.f32 %v545, %v545
          %v554 = vadd.f32 %v552, %v553
          %555 = vst [vmem:[%s551] sm:$0x3] %v554
          %v556 = vmul.f32 %v503, %v509
          %s557 = scalar_lea.vmem [#allocation7], 6
          %v558 = vld [vmem:[%s557] sm:$0x3]
          %v559 = vmul.f32 %v556, %v481
          %v560 = vadd.f32 %v558, %v559
          %561 = vst [vmem:[%s557] sm:$0x3] %v560
          %s562 = scalar_lea.vmem [#allocation8], 6
          %v563 = vld [vmem:[%s562] sm:$0x3]
          %v564 = vmul.f32 %v556, %v556
          %v565 = vadd.f32 %v563, %v564
          %566 = vst [vmem:[%s562] sm:$0x3] %v565
          %v567 = vld [vmem:[%s362] sm:$0x3]
          %s568 = scalar_lea.vmem %s362, 2 [#allocation5]
          %v569 = vld [vmem:[%s568] sm:$0x3]
          %s570 = scalar_lea.vmem %s362, 4 [#allocation5]
          %v571 = vld [vmem:[%s570] sm:$0x3]
          %s572 = scalar_lea.vmem %s362, 6 [#allocation5]
          %v573 = vld [vmem:[%s572] sm:$0x3]
          %v574 = vmax.f32 %v567, %v569
          %v575 = vmax.f32 %v574, %v571
          %v576 = vmax.f32 %v575, %v573
          %v577 = vsub.f32 %v567, %v576
          %v578 = vmul.f32 %v577, 1.442695
          %v579 = vpow.pop %v578
          %v580 = vsub.f32 %v569, %v576
          %v581 = vmul.f32 %v580, 1.442695
          %v582 = vpow.pop %v581
          %v583 = vsub.f32 %v571, %v576
          %v584 = vmul.f32 %v583, 1.442695
          %v585 = vpow.pop %v584
          %v586 = vsub.f32 %v573, %v576
          %v587 = vmul.f32 %v586, 1.442695
          %v588 = vpow.pop %v587
          %v589 = vadd.f32 %v579, %v582
          %v590 = vadd.f32 %v589, %v585
          %v591 = vadd.f32 %v590, %v588
          %v592 = vrcp.pop %v591
          %v593 = vmul.f32 1.0, %v592
          %v594 = vsel %vm468, %v593, 0.0
          %v595 = vmul.f32 %v567, %v472
          %v596 = vmul.f32 %v569, %v475
          %v597 = vadd.f32 %v595, %v596
          %v598 = vmul.f32 %v571, %v478
          %v599 = vadd.f32 %v597, %v598
          %v600 = vmul.f32 %v573, %v481
          %v601 = vadd.f32 %v599, %v600
          %v602 = vlog2.pop %v591
          %v603 = vmul.f32 %v602, 0.6931472
          %v604 = vadd.f32 %v576, %v603
          %v605 = vsub.f32 %v604, %v601
          %v606 = vsel %vm468, %v605, 0.0
          %s607 = scalar_lea.vmem [#allocation11], 2
          %v608 = vld [vmem:[%s607] sm:$0x3]
          %v609 = vadd.f32 %v608, %v606
          %610 = vst [vmem:[%s607] sm:$0x3] %v609
          %v611 = vmul.f32 %v579, %v594
          %s612 = scalar_lea.vmem [#allocation7], 8
          %v613 = vld [vmem:[%s612] sm:$0x3]
          %v614 = vmul.f32 %v611, %v472
          %v615 = vadd.f32 %v613, %v614
          %616 = vst [vmem:[%s612] sm:$0x3] %v615
          %s617 = scalar_lea.vmem [#allocation8], 8
          %v618 = vld [vmem:[%s617] sm:$0x3]
          %v619 = vmul.f32 %v611, %v611
          %v620 = vadd.f32 %v618, %v619
          %621 = vst [vmem:[%s617] sm:$0x3] %v620
          %v622 = vmul.f32 %v582, %v594
          %s623 = scalar_lea.vmem [#allocation7], 10
          %v624 = vld [vmem:[%s623] sm:$0x3]
          %v625 = vmul.f32 %v622, %v475
          %v626 = vadd.f32 %v624, %v625
          %627 = vst [vmem:[%s623] sm:$0x3] %v626
          %s628 = scalar_lea.vmem [#allocation8], 10
          %v629 = vld [vmem:[%s628] sm:$0x3]
          %v630 = vmul.f32 %v622, %v622
          %v631 = vadd.f32 %v629, %v630
          %632 = vst [vmem:[%s628] sm:$0x3] %v631
          %v633 = vmul.f32 %v585, %v594
          %s634 = scalar_lea.vmem [#allocation7], 12
          %v635 = vld [vmem:[%s634] sm:$0x3]
          %v636 = vmul.f32 %v633, %v478
          %v637 = vadd.f32 %v635, %v636
          %638 = vst [vmem:[%s634] sm:$0x3] %v637
          %s639 = scalar_lea.vmem [#allocation8], 12
          %v640 = vld [vmem:[%s639] sm:$0x3]
          %v641 = vmul.f32 %v633, %v633
          %v642 = vadd.f32 %v640, %v641
          %643 = vst [vmem:[%s639] sm:$0x3] %v642
          %v644 = vmul.f32 %v588, %v594
          %s645 = scalar_lea.vmem [#allocation7], 14
          %v646 = vld [vmem:[%s645] sm:$0x3]
          %v647 = vmul.f32 %v644, %v481
          %v648 = vadd.f32 %v646, %v647
          %649 = vst [vmem:[%s645] sm:$0x3] %v648
          %s650 = scalar_lea.vmem [#allocation8], 14
          %v651 = vld [vmem:[%s650] sm:$0x3]
          %v652 = vmul.f32 %v644, %v644
          %v653 = vadd.f32 %v651, %v652
          %654 = vst [vmem:[%s650] sm:$0x3] %v653
          %v655 = vld [vmem:[#allocation10] sm:$0x3]
          %v656 = vadd.f32 %v655, %v472
          %657 = vst [vmem:[#allocation10] sm:$0x3] %v656
          %s658 = scalar_lea.vmem [#allocation10], 2
          %v659 = vld [vmem:[%s658] sm:$0x3]
          %v660 = vadd.f32 %v659, %v475
          %661 = vst [vmem:[%s658] sm:$0x3] %v660
          %s662 = scalar_lea.vmem [#allocation10], 4
          %v663 = vld [vmem:[%s662] sm:$0x3]
          %v664 = vadd.f32 %v663, %v478
          %665 = vst [vmem:[%s662] sm:$0x3] %v664
          %s666 = scalar_lea.vmem [#allocation10], 6
          %v667 = vld [vmem:[%s666] sm:$0x3]
          %v668 = vadd.f32 %v667, %v481
          %669 = vst [vmem:[%s666] sm:$0x3] %v668
        $region48: #{tpu_custom_call.1} parent=31 // pred_fallthru
          _
        // Predicated region
        $region49: #{tpu_custom_call.1} parent=31 // pred_check
          %p670 = pneg %p172
        $region50: #{tpu_custom_call.1} parent=31 // pred_check_branch
          %672 = sbr.rel (%p670) target = $region52
        $region51: #{tpu_custom_call.1} parent=31 // pred_region
          %s674 = ssub.s32 256, 256
          %675 = vsyncadd [#allocation4], %s674
          %s676 = smul.addr %s32, 8
          %s677 = smul.addr %s676, 32
          %s678 = scalar_lea.hbm %s3, %s677
          %s679 = sshll.u32 [#allocation7], 4
          %s680 = int_to_ptr.vmem [resolvable:$true] %s679
          %685 = dma.vmem_to_hbm [thread:$0]  %s680, 256, %s678, [#allocation4], 32, 32, 2
        $region52: #{tpu_custom_call.1} parent=31 // pred_fallthru
          _
        // Predicated region
        $region53: #{tpu_custom_call.1} parent=31 // pred_check
          %p686 = pneg %p198
        $region54: #{tpu_custom_call.1} parent=31 // pred_check_branch
          %688 = sbr.rel (%p686) target = $region56
        $region55: #{tpu_custom_call.1} parent=31 // pred_region
          %s690 = ssub.s32 256, 256
          %691 = vsyncadd [#allocation9], %s690
          %s692 = smul.addr %s32, 8
          %s693 = smul.addr %s692, 32
          %s694 = scalar_lea.hbm %s4, %s693
          %s695 = sshll.u32 [#allocation8], 4
          %s696 = int_to_ptr.vmem [resolvable:$true] %s695
          %701 = dma.vmem_to_hbm [thread:$0]  %s696, 256, %s694, [#allocation9], 32, 32, 2
        $region56: #{tpu_custom_call.1} parent=31 // pred_fallthru
          _
        // Predicated region
        $region57: #{tpu_custom_call.1} parent=31 // pred_check
          %p702 = pneg %p224
        $region58: #{tpu_custom_call.1} parent=31 // pred_check_branch
          %704 = sbr.rel (%p702) target = $region60
        $region59: #{tpu_custom_call.1} parent=31 // pred_region
          %s706 = ssub.s32 128, 128
          %707 = vsyncadd [#allocation9], %s706
          %s708 = smul.addr %s32, 4
          %s709 = smul.addr %s708, 32
          %s710 = scalar_lea.hbm %s5, %s709
          %s711 = sshll.u32 [#allocation10], 4
          %s712 = int_to_ptr.vmem [resolvable:$true] %s711
          %717 = dma.vmem_to_hbm [thread:$0]  %s712, 128, %s710, [#allocation9], 32, 32, 2
        $region60: #{tpu_custom_call.1} parent=31 // pred_fallthru
          _
        // Predicated region
        $region61: #{tpu_custom_call.1} parent=31 // pred_check
          %p718 = pneg %p250
        $region62: #{tpu_custom_call.1} parent=31 // pred_check_branch
          %720 = sbr.rel (%p718) target = $region64
        $region63: #{tpu_custom_call.1} parent=31 // pred_region
          %s722 = ssub.s32 64, 64
          %723 = vsyncadd [#allocation12], %s722
          %s724 = smul.addr %s32, 2
          %s725 = smul.addr %s724, 32
          %s726 = scalar_lea.hbm %s6, %s725
          %s727 = sshll.u32 [#allocation11], 4
          %s728 = int_to_ptr.vmem [resolvable:$true] %s727
          %733 = dma.vmem_to_hbm [thread:$0]  %s728, 64, %s726, [#allocation12], 32, 32, 2
        $region64: #{tpu_custom_call.1} parent=31 // pred_fallthru
          _
        // Predicated region
        $region65: #{tpu_custom_call.1} parent=31 // pred_check
          %p734 = pneg %p172
        $region66: #{tpu_custom_call.1} parent=31 // pred_check_branch
          %736 = sbr.rel (%p734) target = $region68
        $region67: #{tpu_custom_call.1} parent=31 // pred_region
          %737 = dma.done [#allocation4], 256
        $region68: #{tpu_custom_call.1} parent=31 // pred_fallthru
          _
        // Predicated region
        $region69: #{tpu_custom_call.1} parent=31 // pred_check
          %p738 = pneg %p198
        $region70: #{tpu_custom_call.1} parent=31 // pred_check_branch
          %740 = sbr.rel (%p738) target = $region72
        $region71: #{tpu_custom_call.1} parent=31 // pred_region
          %741 = dma.done [#allocation9], 256
        $region72: #{tpu_custom_call.1} parent=31 // pred_fallthru
          _
        // Predicated region
        $region73: #{tpu_custom_call.1} parent=31 // pred_check
          %p742 = pneg %p224
        $region74: #{tpu_custom_call.1} parent=31 // pred_check_branch
          %744 = sbr.rel (%p742) target = $region76
        $region75: #{tpu_custom_call.1} parent=31 // pred_region
          %745 = dma.done [#allocation9], 128
        $region76: #{tpu_custom_call.1} parent=31 // pred_fallthru
          _
        // Predicated region
        $region77: #{tpu_custom_call.1} parent=31 // pred_check
          %p746 = pneg %p250
        $region78: #{tpu_custom_call.1} parent=31 // pred_check_branch
          %748 = sbr.rel (%p746) target = $region80
        $region79: #{tpu_custom_call.1} parent=31 // pred_region
          %749 = dma.done [#allocation12], 64
        $region80: #{tpu_custom_call.1} parent=31 // pred_fallthru
          _
      $region32: #{tpu_custom_call.1} parent=5 // pred_fallthru
        _
      %p750 = scmp.le.s32.totalorder 2, %s22
      // Predicated region
      $region81: #{tpu_custom_call.1} parent=5 // pred_check
        %p751 = pneg %p750
      $region82: #{tpu_custom_call.1} parent=5 // pred_check_branch
        %753 = sbr.rel (%p751) target = $region84
      $region83: #{tpu_custom_call.1} parent=5 // pred_region
        %s754 = ssub.s32 %s22, 2
      $region84: #{tpu_custom_call.1} parent=5 // pred_fallthru
        _
    $region6: #{tpu_custom_call.1} parent=1 // loop_footer
      %s26 = sadd.s32 1, %s22
    $region7: #{tpu_custom_call.1} parent=1 // loop_footer_branch
      %21 = sbr.rel target = $region3
    $region8: #{tpu_custom_call.1} parent=1 // loop_exit
      _
    %755 = vsyncpa [#allocation3], 1
    %s756 = scalar_lea.sflag [#allocation3], 1
    %757 = vsyncpa %s756, 1
    %758 = vsyncpa [#allocation6], 1
    %s759 = scalar_lea.sflag [#allocation6], 1
    %760 = vsyncpa %s759, 1
    %761 = vsyncpa [#allocation4], 1
    %s762 = scalar_lea.sflag [#allocation4], 1
    %763 = vsyncpa %s762, 1
    %764 = vsyncpa [#allocation9], 1
    %765 = vsyncpa [#allocation12], 1

</llo_original>
